<compile_context>
chip_gen: v7x
topology: tpu7x:2x2x1
jax: 0.10.0
libtpu: 0.0.40
codegen_flags: <defaults>
</compile_context>

<pallas_src>
import functools

import jax
import jax.numpy as jnp
from jax import lax
from jax.experimental import pallas as pl
from jax.experimental.pallas import tpu as pltpu


# ---------------------------------------------------------------------------
# Pallas kernel: lane-dense tap-accumulate convolution
# ---------------------------------------------------------------------------
def _make_conv_kernel(T, Cout, L, n_blk):
    """T = Cin*KH*KW taps, L = OH*OW flattened spatial, n_blk images / step."""

    def kernel(xs_ref, w_ref, b_ref, o_ref):
        # xs_ref: VMEM f32[n_blk, T, L]    lane-dense shifted input views
        # w_ref : VMEM f32[T, Cout, 1]     per-tap weight columns
        # b_ref : VMEM f32[Cout, L]        bias, pre-broadcast along lanes
        # o_ref : VMEM f32[n_blk, Cout, L] output slab (NC(HW) layout)
        # Init the accumulator from the bias (single broadcast, hoisted out of
        # the tap loop); leading batch-dim broadcast is register reuse.
        acc = jnp.broadcast_to(b_ref[...][None, :, :], (n_blk, Cout, L))
        for j in range(T):                       # static unroll (T = 36 here)
            slab = xs_ref[:, j:j + 1, :]         # (n_blk, 1, L)  one tap, all images
            wj = w_ref[j:j + 1]                  # (1, Cout, 1)   its weight column
            # One sublane-broadcast (slab) + one lane-broadcast (wj) per tap,
            # amortized over Cout channels and n_blk images; the mul + add run
            # on fully packed (8 x 128) vregs.
            acc = acc + slab * wj
        o_ref[...] = acc.astype(o_ref.dtype)     # single lane-dense store

    return kernel


# ---------------------------------------------------------------------------
# ConvLayer forward: reflection pad + lane-dense repack (wrapper) + kernel
# ---------------------------------------------------------------------------
def conv_layer_forward(x, weight, bias, *, stride=1, num_batch_blocks=1):
    """x: (N, C_in, H, W) NCHW. weight: (C_out, C_in, KH, KW) OIHW. bias: (C_out,).

    num_batch_blocks: 1 on single-TensorCore chips (v5e/v6e); 2 on v7x so both
    TensorCores get a half-batch block.
    """
    Cout, Cin, KH, KW = weight.shape
    N, Cin_x, H, W = x.shape
    assert Cin_x == Cin, (Cin_x, Cin)
    assert KH == KW, "square kernel expected (ReflectionPad2d(kernel_size // 2))"
    pad = KH // 2
    # Reflection padding (like PyTorch) requires pad < spatial extent.
    assert pad < H and pad < W, "ReflectionPad2d needs input larger than pad"
    assert N % num_batch_blocks == 0, (N, num_batch_blocks)
    n_blk = N // num_batch_blocks

    x = x.astype(jnp.float32)                    # no bf16 round-trip (perf review)
    x_pad = jnp.pad(x, ((0, 0), (0, 0), (pad, pad), (pad, pad)), mode="reflect")
    Hp, Wp = H + 2 * pad, W + 2 * pad
    OH = (Hp - KH) // stride + 1
    OW = (Wp - KW) // stride + 1
    L = OH * OW
    T = Cin * KH * KW

    # Wrapper-side lane-dense repack: one (N, L) slab per (kh, kw, ci) tap with
    # the kh/kw shift (and stride decimation) baked in -> the kernel never does
    # a lane-strided slice or an in-register relayout.
    slabs, wcols = [], []
    for kh in range(KH):
        for kw in range(KW):
            win = x_pad[:, :,
                        kh:kh + (OH - 1) * stride + 1:stride,
                        kw:kw + (OW - 1) * stride + 1:stride]   # (N, Cin, OH, OW)
            for ci in range(Cin):
                slabs.append(win[:, ci].reshape(N, L))          # (N, L)
                wcols.append(weight[:, ci, kh, kw].astype(jnp.float32))  # (Cout,)
    xs = jnp.stack(slabs, axis=1)                               # (N, T, L)
    w_taps = jnp.stack(wcols, axis=0)[:, :, None]               # (T, Cout, 1)
    bias_b = jnp.broadcast_to(bias.astype(jnp.float32)[:, None], (Cout, L))

    kernel = _make_conv_kernel(T, Cout, L, n_blk)

    out = pl.pallas_call(
        kernel,
        out_shape=jax.ShapeDtypeStruct((N, Cout, L), jnp.float32),
        grid_spec=pltpu.PrefetchScalarGridSpec(
            num_scalar_prefetch=0,
            grid=(num_batch_blocks,),
            in_specs=[
                pl.BlockSpec((n_blk, T, L), lambda b: (b, 0, 0)),   # input slabs
                pl.BlockSpec((T, Cout, 1), lambda b: (0, 0, 0)),    # weight taps
                pl.BlockSpec((Cout, L), lambda b: (0, 0)),          # bias (lane-bcast)
            ],
            out_specs=pl.BlockSpec((n_blk, Cout, L), lambda b: (b, 0, 0)),
        ),
        compiler_params=pltpu.CompilerParams(
            # batch blocks are independent -> v7x 2-TC sharding when grid=(2,)
            dimension_semantics=("parallel",),
        ),
    )(xs, w_taps, bias_b)
    return out.reshape(N, Cout, OH, OW)


# ---------------------------------------------------------------------------
# Demo / self-test
# ---------------------------------------------------------------------------
if __name__ == "__main__":
    # module config: ConvLayer(in_channels=4, out_channels=8, kernel_size=3, stride=1)
    in_channels, out_channels, kernel_size, stride = 4, 8, 3, 1
    N, H, W = 2, 16, 16

    key = jax.random.PRNGKey(0)
    kx, kw_, kb = jax.random.split(key, 3)

    x = jax.random.normal(kx, (N, in_channels, H, W), dtype=jnp.float32)
    # deterministic synthetic parameters (PyTorch-like fan-in scale)
    fan_in = in_channels * kernel_size * kernel_size
    bound = 1.0 / (fan_in ** 0.5)
    weight = jax.random.uniform(
        kw_, (out_channels, in_channels, kernel_size, kernel_size),
        minval=-bound, maxval=bound, dtype=jnp.float32)
    bias = jax.random.uniform(
        kb, (out_channels,), minval=-bound, maxval=bound, dtype=jnp.float32)

    fwd = jax.jit(functools.partial(conv_layer_forward, stride=stride))
    out = fwd(x, weight, bias)
    jax.block_until_ready(out)

    # Reference: full-f32 XLA conv on the reflection-padded input + bias.
    pad = kernel_size // 2
    x_pad_ref = jnp.pad(x, ((0, 0), (0, 0), (pad, pad), (pad, pad)), mode="reflect")
    ref = lax.conv_general_dilated(
        x_pad_ref, weight, window_strides=(stride, stride), padding="VALID",
        dimension_numbers=("NCHW", "OIHW", "NCHW"),
        precision=lax.Precision.HIGHEST) + bias[None, :, None, None]

    assert out.shape == (N, out_channels, H, W), out.shape
    err = float(jnp.max(jnp.abs(out - ref)))
    assert jnp.allclose(out, ref, atol=1e-4, rtol=1e-4), \
        f"mismatch vs reference conv, max err {err}"

    print("KERNEL_OK")
</pallas_src>

<mosaic_0001>
module attributes {stable_mosaic.version = 11 : i64} {
  func.func @kernel(%arg0: i32, %arg1: memref<2x36x256xf32, #tpu.memory_space<vmem>>, %arg2: memref<36x8x1xf32, #tpu.memory_space<vmem>>, %arg3: memref<8x256xf32, #tpu.memory_space<vmem>>, %arg4: memref<2x8x256xf32, #tpu.memory_space<vmem>>) attributes {dimension_semantics = [#tpu.dimension_semantics<parallel>], iteration_bounds = array<i64: 1>, scalar_prefetch = 0 : i64, scratch_operands = 0 : i64, tpu.core_type = #tpu.core_type<tc>, window_params = [{transform_indices = @transform_0, window_bounds = array<i64: 2, 36, 256>}, {pipeline_mode = #tpu.pipeline_mode<synchronous>, transform_indices = @transform_1, window_bounds = array<i64: 36, 8, 1>}, {pipeline_mode = #tpu.pipeline_mode<synchronous>, transform_indices = @transform_2, window_bounds = array<i64: 8, 256>}, {transform_indices = @transform_3, window_bounds = array<i64: 2, 8, 256>}]} {
    %c0 = arith.constant 0 : index
    %c0_0 = arith.constant 0 : index
    %0 = vector.load %arg3[%c0, %c0_0] : memref<8x256xf32, #tpu.memory_space<vmem>>, vector<8x256xf32>
    %1 = vector.shape_cast %0 : vector<8x256xf32> to vector<1x8x256xf32>
    %2 = vector.shape_cast %1 : vector<1x8x256xf32> to vector<1x8x256xf32>
    %3 = vector.broadcast %2 : vector<1x8x256xf32> to vector<2x8x256xf32>
    %c0_1 = arith.constant 0 : index
    %c0_2 = arith.constant 0 : index
    %c0_3 = arith.constant 0 : index
    %4 = vector.load %arg1[%c0_1, %c0_2, %c0_3] : memref<2x36x256xf32, #tpu.memory_space<vmem>>, vector<2x1x256xf32>
    %c0_4 = arith.constant 0 : index
    %c0_5 = arith.constant 0 : index
    %c0_6 = arith.constant 0 : index
    %5 = vector.load %arg2[%c0_4, %c0_5, %c0_6] : memref<36x8x1xf32, #tpu.memory_space<vmem>>, vector<1x8x1xf32>
    %6 = vector.broadcast %4 : vector<2x1x256xf32> to vector<2x8x256xf32>
    %7 = vector.broadcast %5 : vector<1x8x1xf32> to vector<2x8x256xf32>
    %8 = arith.mulf %6, %7 : vector<2x8x256xf32>
    %9 = arith.addf %3, %8 : vector<2x8x256xf32>
    %c0_7 = arith.constant 0 : index
    %c1 = arith.constant 1 : index
    %c0_8 = arith.constant 0 : index
    %10 = vector.load %arg1[%c0_7, %c1, %c0_8] : memref<2x36x256xf32, #tpu.memory_space<vmem>>, vector<2x1x256xf32>
    %c1_9 = arith.constant 1 : index
    %c0_10 = arith.constant 0 : index
    %c0_11 = arith.constant 0 : index
    %11 = vector.load %arg2[%c1_9, %c0_10, %c0_11] : memref<36x8x1xf32, #tpu.memory_space<vmem>>, vector<1x8x1xf32>
    %12 = vector.broadcast %10 : vector<2x1x256xf32> to vector<2x8x256xf32>
    %13 = vector.broadcast %11 : vector<1x8x1xf32> to vector<2x8x256xf32>
    %14 = arith.mulf %12, %13 : vector<2x8x256xf32>
    %15 = arith.addf %9, %14 : vector<2x8x256xf32>
    %c0_12 = arith.constant 0 : index
    %c2 = arith.constant 2 : index
    %c0_13 = arith.constant 0 : index
    %16 = vector.load %arg1[%c0_12, %c2, %c0_13] : memref<2x36x256xf32, #tpu.memory_space<vmem>>, vector<2x1x256xf32>
    %c2_14 = arith.constant 2 : index
    %c0_15 = arith.constant 0 : index
    %c0_16 = arith.constant 0 : index
    %17 = vector.load %arg2[%c2_14, %c0_15, %c0_16] : memref<36x8x1xf32, #tpu.memory_space<vmem>>, vector<1x8x1xf32>
    %18 = vector.broadcast %16 : vector<2x1x256xf32> to vector<2x8x256xf32>
    %19 = vector.broadcast %17 : vector<1x8x1xf32> to vector<2x8x256xf32>
    %20 = arith.mulf %18, %19 : vector<2x8x256xf32>
    %21 = arith.addf %15, %20 : vector<2x8x256xf32>
    %c0_17 = arith.constant 0 : index
    %c3 = arith.constant 3 : index
    %c0_18 = arith.constant 0 : index
    %22 = vector.load %arg1[%c0_17, %c3, %c0_18] : memref<2x36x256xf32, #tpu.memory_space<vmem>>, vector<2x1x256xf32>
    %c3_19 = arith.constant 3 : index
    %c0_20 = arith.constant 0 : index
    %c0_21 = arith.constant 0 : index
    %23 = vector.load %arg2[%c3_19, %c0_20, %c0_21] : memref<36x8x1xf32, #tpu.memory_space<vmem>>, vector<1x8x1xf32>
    %24 = vector.broadcast %22 : vector<2x1x256xf32> to vector<2x8x256xf32>
    %25 = vector.broadcast %23 : vector<1x8x1xf32> to vector<2x8x256xf32>
    %26 = arith.mulf %24, %25 : vector<2x8x256xf32>
    %27 = arith.addf %21, %26 : vector<2x8x256xf32>
    %c0_22 = arith.constant 0 : index
    %c4 = arith.constant 4 : index
    %c0_23 = arith.constant 0 : index
    %28 = vector.load %arg1[%c0_22, %c4, %c0_23] : memref<2x36x256xf32, #tpu.memory_space<vmem>>, vector<2x1x256xf32>
    %c4_24 = arith.constant 4 : index
    %c0_25 = arith.constant 0 : index
    %c0_26 = arith.constant 0 : index
    %29 = vector.load %arg2[%c4_24, %c0_25, %c0_26] : memref<36x8x1xf32, #tpu.memory_space<vmem>>, vector<1x8x1xf32>
    %30 = vector.broadcast %28 : vector<2x1x256xf32> to vector<2x8x256xf32>
    %31 = vector.broadcast %29 : vector<1x8x1xf32> to vector<2x8x256xf32>
    %32 = arith.mulf %30, %31 : vector<2x8x256xf32>
    %33 = arith.addf %27, %32 : vector<2x8x256xf32>
    %c0_27 = arith.constant 0 : index
    %c5 = arith.constant 5 : index
    %c0_28 = arith.constant 0 : index
    %34 = vector.load %arg1[%c0_27, %c5, %c0_28] : memref<2x36x256xf32, #tpu.memory_space<vmem>>, vector<2x1x256xf32>
    %c5_29 = arith.constant 5 : index
    %c0_30 = arith.constant 0 : index
    %c0_31 = arith.constant 0 : index
    %35 = vector.load %arg2[%c5_29, %c0_30, %c0_31] : memref<36x8x1xf32, #tpu.memory_space<vmem>>, vector<1x8x1xf32>
    %36 = vector.broadcast %34 : vector<2x1x256xf32> to vector<2x8x256xf32>
    %37 = vector.broadcast %35 : vector<1x8x1xf32> to vector<2x8x256xf32>
    %38 = arith.mulf %36, %37 : vector<2x8x256xf32>
    %39 = arith.addf %33, %38 : vector<2x8x256xf32>
    %c0_32 = arith.constant 0 : index
    %c6 = arith.constant 6 : index
    %c0_33 = arith.constant 0 : index
    %40 = vector.load %arg1[%c0_32, %c6, %c0_33] : memref<2x36x256xf32, #tpu.memory_space<vmem>>, vector<2x1x256xf32>
    %c6_34 = arith.constant 6 : index
    %c0_35 = arith.constant 0 : index
    %c0_36 = arith.constant 0 : index
    %41 = vector.load %arg2[%c6_34, %c0_35, %c0_36] : memref<36x8x1xf32, #tpu.memory_space<vmem>>, vector<1x8x1xf32>
    %42 = vector.broadcast %40 : vector<2x1x256xf32> to vector<2x8x256xf32>
    %43 = vector.broadcast %41 : vector<1x8x1xf32> to vector<2x8x256xf32>
    %44 = arith.mulf %42, %43 : vector<2x8x256xf32>
    %45 = arith.addf %39, %44 : vector<2x8x256xf32>
    %c0_37 = arith.constant 0 : index
    %c7 = arith.constant 7 : index
    %c0_38 = arith.constant 0 : index
    %46 = vector.load %arg1[%c0_37, %c7, %c0_38] : memref<2x36x256xf32, #tpu.memory_space<vmem>>, vector<2x1x256xf32>
    %c7_39 = arith.constant 7 : index
    %c0_40 = arith.constant 0 : index
    %c0_41 = arith.constant 0 : index
    %47 = vector.load %arg2[%c7_39, %c0_40, %c0_41] : memref<36x8x1xf32, #tpu.memory_space<vmem>>, vector<1x8x1xf32>
    %48 = vector.broadcast %46 : vector<2x1x256xf32> to vector<2x8x256xf32>
    %49 = vector.broadcast %47 : vector<1x8x1xf32> to vector<2x8x256xf32>
    %50 = arith.mulf %48, %49 : vector<2x8x256xf32>
    %51 = arith.addf %45, %50 : vector<2x8x256xf32>
    %c0_42 = arith.constant 0 : index
    %c8 = arith.constant 8 : index
    %c0_43 = arith.constant 0 : index
    %52 = vector.load %arg1[%c0_42, %c8, %c0_43] : memref<2x36x256xf32, #tpu.memory_space<vmem>>, vector<2x1x256xf32>
    %c8_44 = arith.constant 8 : index
    %c0_45 = arith.constant 0 : index
    %c0_46 = arith.constant 0 : index
    %53 = vector.load %arg2[%c8_44, %c0_45, %c0_46] : memref<36x8x1xf32, #tpu.memory_space<vmem>>, vector<1x8x1xf32>
    %54 = vector.broadcast %52 : vector<2x1x256xf32> to vector<2x8x256xf32>
    %55 = vector.broadcast %53 : vector<1x8x1xf32> to vector<2x8x256xf32>
    %56 = arith.mulf %54, %55 : vector<2x8x256xf32>
    %57 = arith.addf %51, %56 : vector<2x8x256xf32>
    %c0_47 = arith.constant 0 : index
    %c9 = arith.constant 9 : index
    %c0_48 = arith.constant 0 : index
    %58 = vector.load %arg1[%c0_47, %c9, %c0_48] : memref<2x36x256xf32, #tpu.memory_space<vmem>>, vector<2x1x256xf32>
    %c9_49 = arith.constant 9 : index
    %c0_50 = arith.constant 0 : index
    %c0_51 = arith.constant 0 : index
    %59 = vector.load %arg2[%c9_49, %c0_50, %c0_51] : memref<36x8x1xf32, #tpu.memory_space<vmem>>, vector<1x8x1xf32>
    %60 = vector.broadcast %58 : vector<2x1x256xf32> to vector<2x8x256xf32>
    %61 = vector.broadcast %59 : vector<1x8x1xf32> to vector<2x8x256xf32>
    %62 = arith.mulf %60, %61 : vector<2x8x256xf32>
    %63 = arith.addf %57, %62 : vector<2x8x256xf32>
    %c0_52 = arith.constant 0 : index
    %c10 = arith.constant 10 : index
    %c0_53 = arith.constant 0 : index
    %64 = vector.load %arg1[%c0_52, %c10, %c0_53] : memref<2x36x256xf32, #tpu.memory_space<vmem>>, vector<2x1x256xf32>
    %c10_54 = arith.constant 10 : index
    %c0_55 = arith.constant 0 : index
    %c0_56 = arith.constant 0 : index
    %65 = vector.load %arg2[%c10_54, %c0_55, %c0_56] : memref<36x8x1xf32, #tpu.memory_space<vmem>>, vector<1x8x1xf32>
    %66 = vector.broadcast %64 : vector<2x1x256xf32> to vector<2x8x256xf32>
    %67 = vector.broadcast %65 : vector<1x8x1xf32> to vector<2x8x256xf32>
    %68 = arith.mulf %66, %67 : vector<2x8x256xf32>
    %69 = arith.addf %63, %68 : vector<2x8x256xf32>
    %c0_57 = arith.constant 0 : index
    %c11 = arith.constant 11 : index
    %c0_58 = arith.constant 0 : index
    %70 = vector.load %arg1[%c0_57, %c11, %c0_58] : memref<2x36x256xf32, #tpu.memory_space<vmem>>, vector<2x1x256xf32>
    %c11_59 = arith.constant 11 : index
    %c0_60 = arith.constant 0 : index
    %c0_61 = arith.constant 0 : index
    %71 = vector.load %arg2[%c11_59, %c0_60, %c0_61] : memref<36x8x1xf32, #tpu.memory_space<vmem>>, vector<1x8x1xf32>
    %72 = vector.broadcast %70 : vector<2x1x256xf32> to vector<2x8x256xf32>
    %73 = vector.broadcast %71 : vector<1x8x1xf32> to vector<2x8x256xf32>
    %74 = arith.mulf %72, %73 : vector<2x8x256xf32>
    %75 = arith.addf %69, %74 : vector<2x8x256xf32>
    %c0_62 = arith.constant 0 : index
    %c12 = arith.constant 12 : index
    %c0_63 = arith.constant 0 : index
    %76 = vector.load %arg1[%c0_62, %c12, %c0_63] : memref<2x36x256xf32, #tpu.memory_space<vmem>>, vector<2x1x256xf32>
    %c12_64 = arith.constant 12 : index
    %c0_65 = arith.constant 0 : index
    %c0_66 = arith.constant 0 : index
    %77 = vector.load %arg2[%c12_64, %c0_65, %c0_66] : memref<36x8x1xf32, #tpu.memory_space<vmem>>, vector<1x8x1xf32>
    %78 = vector.broadcast %76 : vector<2x1x256xf32> to vector<2x8x256xf32>
    %79 = vector.broadcast %77 : vector<1x8x1xf32> to vector<2x8x256xf32>
    %80 = arith.mulf %78, %79 : vector<2x8x256xf32>
    %81 = arith.addf %75, %80 : vector<2x8x256xf32>
    %c0_67 = arith.constant 0 : index
    %c13 = arith.constant 13 : index
    %c0_68 = arith.constant 0 : index
    %82 = vector.load %arg1[%c0_67, %c13, %c0_68] : memref<2x36x256xf32, #tpu.memory_space<vmem>>, vector<2x1x256xf32>
    %c13_69 = arith.constant 13 : index
    %c0_70 = arith.constant 0 : index
    %c0_71 = arith.constant 0 : index
    %83 = vector.load %arg2[%c13_69, %c0_70, %c0_71] : memref<36x8x1xf32, #tpu.memory_space<vmem>>, vector<1x8x1xf32>
    %84 = vector.broadcast %82 : vector<2x1x256xf32> to vector<2x8x256xf32>
    %85 = vector.broadcast %83 : vector<1x8x1xf32> to vector<2x8x256xf32>
    %86 = arith.mulf %84, %85 : vector<2x8x256xf32>
    %87 = arith.addf %81, %86 : vector<2x8x256xf32>
    %c0_72 = arith.constant 0 : index
    %c14 = arith.constant 14 : index
    %c0_73 = arith.constant 0 : index
    %88 = vector.load %arg1[%c0_72, %c14, %c0_73] : memref<2x36x256xf32, #tpu.memory_space<vmem>>, vector<2x1x256xf32>
    %c14_74 = arith.constant 14 : index
    %c0_75 = arith.constant 0 : index
    %c0_76 = arith.constant 0 : index
    %89 = vector.load %arg2[%c14_74, %c0_75, %c0_76] : memref<36x8x1xf32, #tpu.memory_space<vmem>>, vector<1x8x1xf32>
    %90 = vector.broadcast %88 : vector<2x1x256xf32> to vector<2x8x256xf32>
    %91 = vector.broadcast %89 : vector<1x8x1xf32> to vector<2x8x256xf32>
    %92 = arith.mulf %90, %91 : vector<2x8x256xf32>
    %93 = arith.addf %87, %92 : vector<2x8x256xf32>
    %c0_77 = arith.constant 0 : index
    %c15 = arith.constant 15 : index
    %c0_78 = arith.constant 0 : index
    %94 = vector.load %arg1[%c0_77, %c15, %c0_78] : memref<2x36x256xf32, #tpu.memory_space<vmem>>, vector<2x1x256xf32>
    %c15_79 = arith.constant 15 : index
    %c0_80 = arith.constant 0 : index
    %c0_81 = arith.constant 0 : index
    %95 = vector.load %arg2[%c15_79, %c0_80, %c0_81] : memref<36x8x1xf32, #tpu.memory_space<vmem>>, vector<1x8x1xf32>
    %96 = vector.broadcast %94 : vector<2x1x256xf32> to vector<2x8x256xf32>
    %97 = vector.broadcast %95 : vector<1x8x1xf32> to vector<2x8x256xf32>
    %98 = arith.mulf %96, %97 : vector<2x8x256xf32>
    %99 = arith.addf %93, %98 : vector<2x8x256xf32>
    %c0_82 = arith.constant 0 : index
    %c16 = arith.constant 16 : index
    %c0_83 = arith.constant 0 : index
    %100 = vector.load %arg1[%c0_82, %c16, %c0_83] : memref<2x36x256xf32, #tpu.memory_space<vmem>>, vector<2x1x256xf32>
    %c16_84 = arith.constant 16 : index
    %c0_85 = arith.constant 0 : index
    %c0_86 = arith.constant 0 : index
    %101 = vector.load %arg2[%c16_84, %c0_85, %c0_86] : memref<36x8x1xf32, #tpu.memory_space<vmem>>, vector<1x8x1xf32>
    %102 = vector.broadcast %100 : vector<2x1x256xf32> to vector<2x8x256xf32>
    %103 = vector.broadcast %101 : vector<1x8x1xf32> to vector<2x8x256xf32>
    %104 = arith.mulf %102, %103 : vector<2x8x256xf32>
    %105 = arith.addf %99, %104 : vector<2x8x256xf32>
    %c0_87 = arith.constant 0 : index
    %c17 = arith.constant 17 : index
    %c0_88 = arith.constant 0 : index
    %106 = vector.load %arg1[%c0_87, %c17, %c0_88] : memref<2x36x256xf32, #tpu.memory_space<vmem>>, vector<2x1x256xf32>
    %c17_89 = arith.constant 17 : index
    %c0_90 = arith.constant 0 : index
    %c0_91 = arith.constant 0 : index
    %107 = vector.load %arg2[%c17_89, %c0_90, %c0_91] : memref<36x8x1xf32, #tpu.memory_space<vmem>>, vector<1x8x1xf32>
    %108 = vector.broadcast %106 : vector<2x1x256xf32> to vector<2x8x256xf32>
    %109 = vector.broadcast %107 : vector<1x8x1xf32> to vector<2x8x256xf32>
    %110 = arith.mulf %108, %109 : vector<2x8x256xf32>
    %111 = arith.addf %105, %110 : vector<2x8x256xf32>
    %c0_92 = arith.constant 0 : index
    %c18 = arith.constant 18 : index
    %c0_93 = arith.constant 0 : index
    %112 = vector.load %arg1[%c0_92, %c18, %c0_93] : memref<2x36x256xf32, #tpu.memory_space<vmem>>, vector<2x1x256xf32>
    %c18_94 = arith.constant 18 : index
    %c0_95 = arith.constant 0 : index
    %c0_96 = arith.constant 0 : index
    %113 = vector.load %arg2[%c18_94, %c0_95, %c0_96] : memref<36x8x1xf32, #tpu.memory_space<vmem>>, vector<1x8x1xf32>
    %114 = vector.broadcast %112 : vector<2x1x256xf32> to vector<2x8x256xf32>
    %115 = vector.broadcast %113 : vector<1x8x1xf32> to vector<2x8x256xf32>
    %116 = arith.mulf %114, %115 : vector<2x8x256xf32>
    %117 = arith.addf %111, %116 : vector<2x8x256xf32>
    %c0_97 = arith.constant 0 : index
    %c19 = arith.constant 19 : index
    %c0_98 = arith.constant 0 : index
    %118 = vector.load %arg1[%c0_97, %c19, %c0_98] : memref<2x36x256xf32, #tpu.memory_space<vmem>>, vector<2x1x256xf32>
    %c19_99 = arith.constant 19 : index
    %c0_100 = arith.constant 0 : index
    %c0_101 = arith.constant 0 : index
    %119 = vector.load %arg2[%c19_99, %c0_100, %c0_101] : memref<36x8x1xf32, #tpu.memory_space<vmem>>, vector<1x8x1xf32>
    %120 = vector.broadcast %118 : vector<2x1x256xf32> to vector<2x8x256xf32>
    %121 = vector.broadcast %119 : vector<1x8x1xf32> to vector<2x8x256xf32>
    %122 = arith.mulf %120, %121 : vector<2x8x256xf32>
    %123 = arith.addf %117, %122 : vector<2x8x256xf32>
    %c0_102 = arith.constant 0 : index
    %c20 = arith.constant 20 : index
    %c0_103 = arith.constant 0 : index
    %124 = vector.load %arg1[%c0_102, %c20, %c0_103] : memref<2x36x256xf32, #tpu.memory_space<vmem>>, vector<2x1x256xf32>
    %c20_104 = arith.constant 20 : index
    %c0_105 = arith.constant 0 : index
    %c0_106 = arith.constant 0 : index
    %125 = vector.load %arg2[%c20_104, %c0_105, %c0_106] : memref<36x8x1xf32, #tpu.memory_space<vmem>>, vector<1x8x1xf32>
    %126 = vector.broadcast %124 : vector<2x1x256xf32> to vector<2x8x256xf32>
    %127 = vector.broadcast %125 : vector<1x8x1xf32> to vector<2x8x256xf32>
    %128 = arith.mulf %126, %127 : vector<2x8x256xf32>
    %129 = arith.addf %123, %128 : vector<2x8x256xf32>
    %c0_107 = arith.constant 0 : index
    %c21 = arith.constant 21 : index
    %c0_108 = arith.constant 0 : index
    %130 = vector.load %arg1[%c0_107, %c21, %c0_108] : memref<2x36x256xf32, #tpu.memory_space<vmem>>, vector<2x1x256xf32>
    %c21_109 = arith.constant 21 : index
    %c0_110 = arith.constant 0 : index
    %c0_111 = arith.constant 0 : index
    %131 = vector.load %arg2[%c21_109, %c0_110, %c0_111] : memref<36x8x1xf32, #tpu.memory_space<vmem>>, vector<1x8x1xf32>
    %132 = vector.broadcast %130 : vector<2x1x256xf32> to vector<2x8x256xf32>
    %133 = vector.broadcast %131 : vector<1x8x1xf32> to vector<2x8x256xf32>
    %134 = arith.mulf %132, %133 : vector<2x8x256xf32>
    %135 = arith.addf %129, %134 : vector<2x8x256xf32>
    %c0_112 = arith.constant 0 : index
    %c22 = arith.constant 22 : index
    %c0_113 = arith.constant 0 : index
    %136 = vector.load %arg1[%c0_112, %c22, %c0_113] : memref<2x36x256xf32, #tpu.memory_space<vmem>>, vector<2x1x256xf32>
    %c22_114 = arith.constant 22 : index
    %c0_115 = arith.constant 0 : index
    %c0_116 = arith.constant 0 : index
    %137 = vector.load %arg2[%c22_114, %c0_115, %c0_116] : memref<36x8x1xf32, #tpu.memory_space<vmem>>, vector<1x8x1xf32>
    %138 = vector.broadcast %136 : vector<2x1x256xf32> to vector<2x8x256xf32>
    %139 = vector.broadcast %137 : vector<1x8x1xf32> to vector<2x8x256xf32>
    %140 = arith.mulf %138, %139 : vector<2x8x256xf32>
    %141 = arith.addf %135, %140 : vector<2x8x256xf32>
    %c0_117 = arith.constant 0 : index
    %c23 = arith.constant 23 : index
    %c0_118 = arith.constant 0 : index
    %142 = vector.load %arg1[%c0_117, %c23, %c0_118] : memref<2x36x256xf32, #tpu.memory_space<vmem>>, vector<2x1x256xf32>
    %c23_119 = arith.constant 23 : index
    %c0_120 = arith.constant 0 : index
    %c0_121 = arith.constant 0 : index
    %143 = vector.load %arg2[%c23_119, %c0_120, %c0_121] : memref<36x8x1xf32, #tpu.memory_space<vmem>>, vector<1x8x1xf32>
    %144 = vector.broadcast %142 : vector<2x1x256xf32> to vector<2x8x256xf32>
    %145 = vector.broadcast %143 : vector<1x8x1xf32> to vector<2x8x256xf32>
    %146 = arith.mulf %144, %145 : vector<2x8x256xf32>
    %147 = arith.addf %141, %146 : vector<2x8x256xf32>
    %c0_122 = arith.constant 0 : index
    %c24 = arith.constant 24 : index
    %c0_123 = arith.constant 0 : index
    %148 = vector.load %arg1[%c0_122, %c24, %c0_123] : memref<2x36x256xf32, #tpu.memory_space<vmem>>, vector<2x1x256xf32>
    %c24_124 = arith.constant 24 : index
    %c0_125 = arith.constant 0 : index
    %c0_126 = arith.constant 0 : index
    %149 = vector.load %arg2[%c24_124, %c0_125, %c0_126] : memref<36x8x1xf32, #tpu.memory_space<vmem>>, vector<1x8x1xf32>
    %150 = vector.broadcast %148 : vector<2x1x256xf32> to vector<2x8x256xf32>
    %151 = vector.broadcast %149 : vector<1x8x1xf32> to vector<2x8x256xf32>
    %152 = arith.mulf %150, %151 : vector<2x8x256xf32>
    %153 = arith.addf %147, %152 : vector<2x8x256xf32>
    %c0_127 = arith.constant 0 : index
    %c25 = arith.constant 25 : index
    %c0_128 = arith.constant 0 : index
    %154 = vector.load %arg1[%c0_127, %c25, %c0_128] : memref<2x36x256xf32, #tpu.memory_space<vmem>>, vector<2x1x256xf32>
    %c25_129 = arith.constant 25 : index
    %c0_130 = arith.constant 0 : index
    %c0_131 = arith.constant 0 : index
    %155 = vector.load %arg2[%c25_129, %c0_130, %c0_131] : memref<36x8x1xf32, #tpu.memory_space<vmem>>, vector<1x8x1xf32>
    %156 = vector.broadcast %154 : vector<2x1x256xf32> to vector<2x8x256xf32>
    %157 = vector.broadcast %155 : vector<1x8x1xf32> to vector<2x8x256xf32>
    %158 = arith.mulf %156, %157 : vector<2x8x256xf32>
    %159 = arith.addf %153, %158 : vector<2x8x256xf32>
    %c0_132 = arith.constant 0 : index
    %c26 = arith.constant 26 : index
    %c0_133 = arith.constant 0 : index
    %160 = vector.load %arg1[%c0_132, %c26, %c0_133] : memref<2x36x256xf32, #tpu.memory_space<vmem>>, vector<2x1x256xf32>
    %c26_134 = arith.constant 26 : index
    %c0_135 = arith.constant 0 : index
    %c0_136 = arith.constant 0 : index
    %161 = vector.load %arg2[%c26_134, %c0_135, %c0_136] : memref<36x8x1xf32, #tpu.memory_space<vmem>>, vector<1x8x1xf32>
    %162 = vector.broadcast %160 : vector<2x1x256xf32> to vector<2x8x256xf32>
    %163 = vector.broadcast %161 : vector<1x8x1xf32> to vector<2x8x256xf32>
    %164 = arith.mulf %162, %163 : vector<2x8x256xf32>
    %165 = arith.addf %159, %164 : vector<2x8x256xf32>
    %c0_137 = arith.constant 0 : index
    %c27 = arith.constant 27 : index
    %c0_138 = arith.constant 0 : index
    %166 = vector.load %arg1[%c0_137, %c27, %c0_138] : memref<2x36x256xf32, #tpu.memory_space<vmem>>, vector<2x1x256xf32>
    %c27_139 = arith.constant 27 : index
    %c0_140 = arith.constant 0 : index
    %c0_141 = arith.constant 0 : index
    %167 = vector.load %arg2[%c27_139, %c0_140, %c0_141] : memref<36x8x1xf32, #tpu.memory_space<vmem>>, vector<1x8x1xf32>
    %168 = vector.broadcast %166 : vector<2x1x256xf32> to vector<2x8x256xf32>
    %169 = vector.broadcast %167 : vector<1x8x1xf32> to vector<2x8x256xf32>
    %170 = arith.mulf %168, %169 : vector<2x8x256xf32>
    %171 = arith.addf %165, %170 : vector<2x8x256xf32>
    %c0_142 = arith.constant 0 : index
    %c28 = arith.constant 28 : index
    %c0_143 = arith.constant 0 : index
    %172 = vector.load %arg1[%c0_142, %c28, %c0_143] : memref<2x36x256xf32, #tpu.memory_space<vmem>>, vector<2x1x256xf32>
    %c28_144 = arith.constant 28 : index
    %c0_145 = arith.constant 0 : index
    %c0_146 = arith.constant 0 : index
    %173 = vector.load %arg2[%c28_144, %c0_145, %c0_146] : memref<36x8x1xf32, #tpu.memory_space<vmem>>, vector<1x8x1xf32>
    %174 = vector.broadcast %172 : vector<2x1x256xf32> to vector<2x8x256xf32>
    %175 = vector.broadcast %173 : vector<1x8x1xf32> to vector<2x8x256xf32>
    %176 = arith.mulf %174, %175 : vector<2x8x256xf32>
    %177 = arith.addf %171, %176 : vector<2x8x256xf32>
    %c0_147 = arith.constant 0 : index
    %c29 = arith.constant 29 : index
    %c0_148 = arith.constant 0 : index
    %178 = vector.load %arg1[%c0_147, %c29, %c0_148] : memref<2x36x256xf32, #tpu.memory_space<vmem>>, vector<2x1x256xf32>
    %c29_149 = arith.constant 29 : index
    %c0_150 = arith.constant 0 : index
    %c0_151 = arith.constant 0 : index
    %179 = vector.load %arg2[%c29_149, %c0_150, %c0_151] : memref<36x8x1xf32, #tpu.memory_space<vmem>>, vector<1x8x1xf32>
    %180 = vector.broadcast %178 : vector<2x1x256xf32> to vector<2x8x256xf32>
    %181 = vector.broadcast %179 : vector<1x8x1xf32> to vector<2x8x256xf32>
    %182 = arith.mulf %180, %181 : vector<2x8x256xf32>
    %183 = arith.addf %177, %182 : vector<2x8x256xf32>
    %c0_152 = arith.constant 0 : index
    %c30 = arith.constant 30 : index
    %c0_153 = arith.constant 0 : index
    %184 = vector.load %arg1[%c0_152, %c30, %c0_153] : memref<2x36x256xf32, #tpu.memory_space<vmem>>, vector<2x1x256xf32>
    %c30_154 = arith.constant 30 : index
    %c0_155 = arith.constant 0 : index
    %c0_156 = arith.constant 0 : index
    %185 = vector.load %arg2[%c30_154, %c0_155, %c0_156] : memref<36x8x1xf32, #tpu.memory_space<vmem>>, vector<1x8x1xf32>
    %186 = vector.broadcast %184 : vector<2x1x256xf32> to vector<2x8x256xf32>
    %187 = vector.broadcast %185 : vector<1x8x1xf32> to vector<2x8x256xf32>
    %188 = arith.mulf %186, %187 : vector<2x8x256xf32>
    %189 = arith.addf %183, %188 : vector<2x8x256xf32>
    %c0_157 = arith.constant 0 : index
    %c31 = arith.constant 31 : index
    %c0_158 = arith.constant 0 : index
    %190 = vector.load %arg1[%c0_157, %c31, %c0_158] : memref<2x36x256xf32, #tpu.memory_space<vmem>>, vector<2x1x256xf32>
    %c31_159 = arith.constant 31 : index
    %c0_160 = arith.constant 0 : index
    %c0_161 = arith.constant 0 : index
    %191 = vector.load %arg2[%c31_159, %c0_160, %c0_161] : memref<36x8x1xf32, #tpu.memory_space<vmem>>, vector<1x8x1xf32>
    %192 = vector.broadcast %190 : vector<2x1x256xf32> to vector<2x8x256xf32>
    %193 = vector.broadcast %191 : vector<1x8x1xf32> to vector<2x8x256xf32>
    %194 = arith.mulf %192, %193 : vector<2x8x256xf32>
    %195 = arith.addf %189, %194 : vector<2x8x256xf32>
    %c0_162 = arith.constant 0 : index
    %c32 = arith.constant 32 : index
    %c0_163 = arith.constant 0 : index
    %196 = vector.load %arg1[%c0_162, %c32, %c0_163] : memref<2x36x256xf32, #tpu.memory_space<vmem>>, vector<2x1x256xf32>
    %c32_164 = arith.constant 32 : index
    %c0_165 = arith.constant 0 : index
    %c0_166 = arith.constant 0 : index
    %197 = vector.load %arg2[%c32_164, %c0_165, %c0_166] : memref<36x8x1xf32, #tpu.memory_space<vmem>>, vector<1x8x1xf32>
    %198 = vector.broadcast %196 : vector<2x1x256xf32> to vector<2x8x256xf32>
    %199 = vector.broadcast %197 : vector<1x8x1xf32> to vector<2x8x256xf32>
    %200 = arith.mulf %198, %199 : vector<2x8x256xf32>
    %201 = arith.addf %195, %200 : vector<2x8x256xf32>
    %c0_167 = arith.constant 0 : index
    %c33 = arith.constant 33 : index
    %c0_168 = arith.constant 0 : index
    %202 = vector.load %arg1[%c0_167, %c33, %c0_168] : memref<2x36x256xf32, #tpu.memory_space<vmem>>, vector<2x1x256xf32>
    %c33_169 = arith.constant 33 : index
    %c0_170 = arith.constant 0 : index
    %c0_171 = arith.constant 0 : index
    %203 = vector.load %arg2[%c33_169, %c0_170, %c0_171] : memref<36x8x1xf32, #tpu.memory_space<vmem>>, vector<1x8x1xf32>
    %204 = vector.broadcast %202 : vector<2x1x256xf32> to vector<2x8x256xf32>
    %205 = vector.broadcast %203 : vector<1x8x1xf32> to vector<2x8x256xf32>
    %206 = arith.mulf %204, %205 : vector<2x8x256xf32>
    %207 = arith.addf %201, %206 : vector<2x8x256xf32>
    %c0_172 = arith.constant 0 : index
    %c34 = arith.constant 34 : index
    %c0_173 = arith.constant 0 : index
    %208 = vector.load %arg1[%c0_172, %c34, %c0_173] : memref<2x36x256xf32, #tpu.memory_space<vmem>>, vector<2x1x256xf32>
    %c34_174 = arith.constant 34 : index
    %c0_175 = arith.constant 0 : index
    %c0_176 = arith.constant 0 : index
    %209 = vector.load %arg2[%c34_174, %c0_175, %c0_176] : memref<36x8x1xf32, #tpu.memory_space<vmem>>, vector<1x8x1xf32>
    %210 = vector.broadcast %208 : vector<2x1x256xf32> to vector<2x8x256xf32>
    %211 = vector.broadcast %209 : vector<1x8x1xf32> to vector<2x8x256xf32>
    %212 = arith.mulf %210, %211 : vector<2x8x256xf32>
    %213 = arith.addf %207, %212 : vector<2x8x256xf32>
    %c0_177 = arith.constant 0 : index
    %c35 = arith.constant 35 : index
    %c0_178 = arith.constant 0 : index
    %214 = vector.load %arg1[%c0_177, %c35, %c0_178] : memref<2x36x256xf32, #tpu.memory_space<vmem>>, vector<2x1x256xf32>
    %c35_179 = arith.constant 35 : index
    %c0_180 = arith.constant 0 : index
    %c0_181 = arith.constant 0 : index
    %215 = vector.load %arg2[%c35_179, %c0_180, %c0_181] : memref<36x8x1xf32, #tpu.memory_space<vmem>>, vector<1x8x1xf32>
    %216 = vector.broadcast %214 : vector<2x1x256xf32> to vector<2x8x256xf32>
    %217 = vector.broadcast %215 : vector<1x8x1xf32> to vector<2x8x256xf32>
    %218 = arith.mulf %216, %217 : vector<2x8x256xf32>
    %219 = arith.addf %213, %218 : vector<2x8x256xf32>
    %c0_182 = arith.constant 0 : index
    %c0_183 = arith.constant 0 : index
    %c0_184 = arith.constant 0 : index
    %220 = vector.load %arg4[%c0_182, %c0_183, %c0_184] : memref<2x8x256xf32, #tpu.memory_space<vmem>>, vector<2x8x256xf32>
    tpu.vector_store %arg4[%c0_182, %c0_183, %c0_184], %219 {strides = array<i32>} : memref<2x8x256xf32, #tpu.memory_space<vmem>>, vector<2x8x256xf32>,
    return
  }
  func.func @transform_0(%arg0: i32) -> (i32, i32, i32) {
    %c0_i32 = arith.constant 0 : i32
    %c0_i32_0 = arith.constant 0 : i32
    %c0_i32_1 = arith.constant 0 : i32
    return %arg0, %c0_i32, %c0_i32_0 : i32, i32, i32
  }
  func.func @transform_1(%arg0: i32) -> (i32, i32, i32) {
    %c0_i32 = arith.constant 0 : i32
    %c0_i32_0 = arith.constant 0 : i32
    %c0_i32_1 = arith.constant 0 : i32
    %c0_i32_2 = arith.constant 0 : i32
    return %c0_i32, %c0_i32_0, %c0_i32_1 : i32, i32, i32
  }
  func.func @transform_2(%arg0: i32) -> (i32, i32) {
    %c0_i32 = arith.constant 0 : i32
    %c0_i32_0 = arith.constant 0 : i32
    %c0_i32_1 = arith.constant 0 : i32
    return %c0_i32, %c0_i32_0 : i32, i32
  }
  func.func @transform_3(%arg0: i32) -> (i32, i32, i32) {
    %c0_i32 = arith.constant 0 : i32
    %c0_i32_0 = arith.constant 0 : i32
    %c0_i32_1 = arith.constant 0 : i32
    return %arg0, %c0_i32, %c0_i32_0 : i32, i32, i32
  }
}

</mosaic_0001>

<llo_original>
// kernel: squeeze.104
$region0: #{squeeze.104}
  %s0 = inlined_call_operand.vmem [shape: f32[2,1,16,16], index: 0, kind: input, shape index: {}]
  %s1 = inlined_call_operand.vmem [shape: f32[2,1,256], index: 1, kind: output, shape index: {}]
  $region1: #{squeeze.104} parent=0
    #allocation0 [shape = 'u8[16384]{0}', space=vmem, size = 0x4000, scoped, tag = 'scoped mem for output reshape']
    %v2 = vld [vmem:[%s0] ss:$8 sm:$0xf]
    %vm3 = vcmask 130048
    %4 = vst.msk [vmem:[#allocation0] ss:$8 sm:$0xf] %vm3, %v2
    %s5 = scalar_lea.vmem %s0, 7
    %v6 = vld [vmem:[%s5] ss:$8 sm:$0xf]
    %7 = vrot.lane.b32.xlu0 %v6, 112
    %v8 = vpop.permute.xlu0 %7
    %vm9 = vcmask 1048448
    %10 = vst.msk [vmem:[#allocation0] ss:$8 sm:$0xf] %vm9, %v8
    %s11 = scalar_lea.vmem %s0, 6
    %v12 = vld [vmem:[%s11] ss:$8 sm:$0xf]
    %13 = vrot.lane.b32.xlu0 %v12, 96
    %v14 = vpop.permute.xlu0 %13
    %vm15 = vcmask 917248
    %16 = vst.msk [vmem:[#allocation0] ss:$8 sm:$0xf] %vm15, %v14
    %s17 = scalar_lea.vmem %s0, 5
    %v18 = vld [vmem:[%s17] ss:$8 sm:$0xf]
    %19 = vrot.lane.b32.xlu0 %v18, 80
    %v20 = vpop.permute.xlu0 %19
    %vm21 = vcmask 786048
    %22 = vst.msk [vmem:[#allocation0] ss:$8 sm:$0xf] %vm21, %v20
    %s23 = scalar_lea.vmem %s0, 4
    %v24 = vld [vmem:[%s23] ss:$8 sm:$0xf]
    %25 = vrot.lane.b32.xlu0 %v24, 64
    %v26 = vpop.permute.xlu0 %25
    %vm27 = vcmask 654848
    %28 = vst.msk [vmem:[#allocation0] ss:$8 sm:$0xf] %vm27, %v26
    %s29 = scalar_lea.vmem %s0, 3
    %v30 = vld [vmem:[%s29] ss:$8 sm:$0xf]
    %31 = vrot.lane.b32.xlu0 %v30, 48
    %v32 = vpop.permute.xlu0 %31
    %vm33 = vcmask 523648
    %34 = vst.msk [vmem:[#allocation0] ss:$8 sm:$0xf] %vm33, %v32
    %s35 = scalar_lea.vmem %s0, 2
    %v36 = vld [vmem:[%s35] ss:$8 sm:$0xf]
    %37 = vrot.lane.b32.xlu0 %v36, 32
    %v38 = vpop.permute.xlu0 %37
    %vm39 = vcmask 392448
    %40 = vst.msk [vmem:[#allocation0] ss:$8 sm:$0xf] %vm39, %v38
    %s41 = scalar_lea.vmem %s0, 1
    %v42 = vld [vmem:[%s41] ss:$8 sm:$0xf]
    %43 = vrot.lane.b32.xlu0 %v42, 16
    %v44 = vpop.permute.xlu0 %43
    %vm45 = vcmask 261248
    %46 = vst.msk [vmem:[#allocation0] ss:$8 sm:$0xf] %vm45, %v44
    %s48 = sshllo.u32 0, 1
    %v50 = vld [vmem:[#allocation0] sm:%s48]
    %s51 = sshllo.u32 0, 1
    %52 = vst [vmem:[%s1] sm:%s51] %v50
    %s53 = scalar_lea.vmem [#allocation0], 8
    %v54 = vld [vmem:[%s53] sm:%s48]
    %s55 = sshllo.u32 0, 1
    %s56 = scalar_lea.vmem %s1, 1
    %57 = vst [vmem:[%s56] sm:%s55] %v54
    %s58 = scalar_lea.vmem [#allocation0], 16
    %v59 = vld [vmem:[%s58] sm:%s48]
    %s60 = sshllo.u32 0, 1
    %s61 = smul.addr 1, 2
    %s62 = scalar_lea.vmem %s1, %s61
    %63 = vst [vmem:[%s62] sm:%s60] %v59
    %s64 = scalar_lea.vmem [#allocation0], 24
    %v65 = vld [vmem:[%s64] sm:%s48]
    %s66 = sshllo.u32 0, 1
    %s67 = smul.addr 1, 3
    %s68 = scalar_lea.vmem %s1, %s67
    %69 = vst [vmem:[%s68] sm:%s66] %v65

// kernel: conv_layer_forward.1
$region0: #{conv_layer_forward.1}
  #allocation0 [shape = 'u32[]', space=smem, size = 0x4, offset = 0x4, fixed_abs, tag = 'smem constant byte address 0x4 - core index']
  #allocation1 [shape = 'u32[144,128]{1,0:T(1,128)}', space=vmem, size = 0x12000, scoped, tag = 'internal scratch']
  %s0 = inlined_call_operand.vmem [shape: f32[2,36,256], index: 0, kind: input, shape index: {}]
  %s1 = inlined_call_operand.vmem [shape: f32[36,8,1], index: 1, kind: input, shape index: {}]
  %s2 = inlined_call_operand.vmem [shape: f32[8,256], index: 2, kind: input, shape index: {}]
  %s3 = inlined_call_operand.vmem [shape: f32[2,8,256], index: 3, kind: output, shape index: {}]
  %s4 = sld [smem:[#allocation0]]
  $region22: #{conv_layer_forward.1} parent=0
    _
  %s6 = ssub.s32 1, %s4
  %s7 = scalar_select 0, %s6, %s4
  // Predicated region
  $region2: #{conv_layer_forward.1} parent=0 // pred_check
    _
  $region3: #{conv_layer_forward.1} parent=0 // pred_check_branch
    %9 = sbr.rel (0) target = $region5
  $region4: #{conv_layer_forward.1} parent=0 // pred_region
    _
  $region5: #{conv_layer_forward.1} parent=0 // pred_fallthru
    _
  // Predicated region
  $region6: #{conv_layer_forward.1} parent=0 // pred_check
    _
  $region7: #{conv_layer_forward.1} parent=0 // pred_check_branch
    %11 = sbr.rel (0) target = $region9
  $region8: #{conv_layer_forward.1} parent=0 // pred_region
    _
  $region9: #{conv_layer_forward.1} parent=0 // pred_fallthru
    _
  // Predicated region
  $region10: #{conv_layer_forward.1} parent=0 // pred_check
    _
  $region11: #{conv_layer_forward.1} parent=0 // pred_check_branch
    %13 = sbr.rel (0) target = $region13
  $region12: #{conv_layer_forward.1} parent=0 // pred_region
    _
  $region13: #{conv_layer_forward.1} parent=0 // pred_fallthru
    _
  %v14 = vld [vmem:[%s2] sm:$0xff]
  %v15 = vld [vmem:[%s2 + $0x8] sm:$0xff]
  %v16 = vld [vmem:[%s0] ss:$8 sm:$0x3]
  %s17 = scalar_lea.vmem %s0, 80
  %v18 = vld [vmem:[%s17] ss:$8 sm:$0x3]
  %v19 = vld [vmem:[%s1] sm:$0xff]
  %v22 = vlaneseq
  %v23 = vshrl.u32 %v22, 7
  %v24 = vsub.s32 0, %v23
  %v25 = vrot.slane %v16, %v24
  %v26 = vlaneseq
  %v27 = vshrl.u32 %v26, 7
  %v28 = vsub.s32 1, %v27
  %v29 = vrot.slane %v16, %v28
  %v30 = vlaneseq
  %v31 = vshrl.u32 %v30, 7
  %v32 = vsub.s32 0, %v31
  %v33 = vrot.slane %v18, %v32
  %v34 = vlaneseq
  %v35 = vshrl.u32 %v34, 7
  %v36 = vsub.s32 1, %v35
  %v37 = vrot.slane %v18, %v36
  %43 = vset.pattern.permute.xlu0 0
  %44 = vperm.xlu0 %43, %v19
  %v45 = vpop.permute.xlu0 %44
  %v47 = vmul.f32 %v25, %v45
  %v48 = vmul.f32 %v29, %v45
  %v49 = vmul.f32 %v33, %v45
  %v50 = vmul.f32 %v37, %v45
  %v51 = vadd.f32 %v14, %v47
  %v52 = vadd.f32 %v15, %v48
  %v53 = vadd.f32 %v14, %v49
  %v54 = vadd.f32 %v15, %v50
  %s55 = scalar_lea.vmem %s0, 1
  %v56 = vld [vmem:[%s55] ss:$8 sm:$0x3]
  %s57 = scalar_lea.vmem %s0, 81
  %v58 = vld [vmem:[%s57] ss:$8 sm:$0x3]
  %s59 = scalar_lea.vmem %s1, 8
  %v60 = vld [vmem:[%s59] sm:$0xff]
  %v63 = vlaneseq
  %v64 = vshrl.u32 %v63, 7
  %v65 = vsub.s32 0, %v64
  %v66 = vrot.slane %v56, %v65
  %v67 = vlaneseq
  %v68 = vshrl.u32 %v67, 7
  %v69 = vsub.s32 1, %v68
  %v70 = vrot.slane %v56, %v69
  %v71 = vlaneseq
  %v72 = vshrl.u32 %v71, 7
  %v73 = vsub.s32 0, %v72
  %v74 = vrot.slane %v58, %v73
  %v75 = vlaneseq
  %v76 = vshrl.u32 %v75, 7
  %v77 = vsub.s32 1, %v76
  %v78 = vrot.slane %v58, %v77
  %84 = vset.pattern.permute.xlu0 0
  %85 = vperm.xlu0 %84, %v60
  %v86 = vpop.permute.xlu0 %85
  %v88 = vmul.f32 %v66, %v86
  %v89 = vmul.f32 %v70, %v86
  %v90 = vmul.f32 %v74, %v86
  %v91 = vmul.f32 %v78, %v86
  %v92 = vadd.f32 %v51, %v88
  %v93 = vadd.f32 %v52, %v89
  %v94 = vadd.f32 %v53, %v90
  %v95 = vadd.f32 %v54, %v91
  %s96 = scalar_lea.vmem %s0, 2
  %v97 = vld [vmem:[%s96] ss:$8 sm:$0x3]
  %s98 = scalar_lea.vmem %s0, 82
  %v99 = vld [vmem:[%s98] ss:$8 sm:$0x3]
  %s100 = scalar_lea.vmem %s1, 16
  %v101 = vld [vmem:[%s100] sm:$0xff]
  %v104 = vlaneseq
  %v105 = vshrl.u32 %v104, 7
  %v106 = vsub.s32 0, %v105
  %v107 = vrot.slane %v97, %v106
  %v108 = vlaneseq
  %v109 = vshrl.u32 %v108, 7
  %v110 = vsub.s32 1, %v109
  %v111 = vrot.slane %v97, %v110
  %v112 = vlaneseq
  %v113 = vshrl.u32 %v112, 7
  %v114 = vsub.s32 0, %v113
  %v115 = vrot.slane %v99, %v114
  %v116 = vlaneseq
  %v117 = vshrl.u32 %v116, 7
  %v118 = vsub.s32 1, %v117
  %v119 = vrot.slane %v99, %v118
  %125 = vset.pattern.permute.xlu0 0
  %126 = vperm.xlu0 %125, %v101
  %v127 = vpop.permute.xlu0 %126
  %v129 = vmul.f32 %v107, %v127
  %v130 = vmul.f32 %v111, %v127
  %v131 = vmul.f32 %v115, %v127
  %v132 = vmul.f32 %v119, %v127
  %v133 = vadd.f32 %v92, %v129
  %v134 = vadd.f32 %v93, %v130
  %v135 = vadd.f32 %v94, %v131
  %v136 = vadd.f32 %v95, %v132
  %s137 = scalar_lea.vmem %s0, 3
  %v138 = vld [vmem:[%s137] ss:$8 sm:$0x3]
  %s139 = scalar_lea.vmem %s0, 83
  %v140 = vld [vmem:[%s139] ss:$8 sm:$0x3]
  %s141 = scalar_lea.vmem %s1, 24
  %v142 = vld [vmem:[%s141] sm:$0xff]
  %v145 = vlaneseq
  %v146 = vshrl.u32 %v145, 7
  %v147 = vsub.s32 0, %v146
  %v148 = vrot.slane %v138, %v147
  %v149 = vlaneseq
  %v150 = vshrl.u32 %v149, 7
  %v151 = vsub.s32 1, %v150
  %v152 = vrot.slane %v138, %v151
  %v153 = vlaneseq
  %v154 = vshrl.u32 %v153, 7
  %v155 = vsub.s32 0, %v154
  %v156 = vrot.slane %v140, %v155
  %v157 = vlaneseq
  %v158 = vshrl.u32 %v157, 7
  %v159 = vsub.s32 1, %v158
  %v160 = vrot.slane %v140, %v159
  %166 = vset.pattern.permute.xlu0 0
  %167 = vperm.xlu0 %166, %v142
  %v168 = vpop.permute.xlu0 %167
  %v170 = vmul.f32 %v148, %v168
  %v171 = vmul.f32 %v152, %v168
  %v172 = vmul.f32 %v156, %v168
  %v173 = vmul.f32 %v160, %v168
  %v174 = vadd.f32 %v133, %v170
  %v175 = vadd.f32 %v134, %v171
  %v176 = vadd.f32 %v135, %v172
  %v177 = vadd.f32 %v136, %v173
  %s178 = scalar_lea.vmem %s0, 4
  %v179 = vld [vmem:[%s178] ss:$8 sm:$0x3]
  %s180 = scalar_lea.vmem %s0, 84
  %v181 = vld [vmem:[%s180] ss:$8 sm:$0x3]
  %s182 = scalar_lea.vmem %s1, 32
  %v183 = vld [vmem:[%s182] sm:$0xff]
  %v186 = vlaneseq
  %v187 = vshrl.u32 %v186, 7
  %v188 = vsub.s32 0, %v187
  %v189 = vrot.slane %v179, %v188
  %v190 = vlaneseq
  %v191 = vshrl.u32 %v190, 7
  %v192 = vsub.s32 1, %v191
  %v193 = vrot.slane %v179, %v192
  %v194 = vlaneseq
  %v195 = vshrl.u32 %v194, 7
  %v196 = vsub.s32 0, %v195
  %v197 = vrot.slane %v181, %v196
  %v198 = vlaneseq
  %v199 = vshrl.u32 %v198, 7
  %v200 = vsub.s32 1, %v199
  %v201 = vrot.slane %v181, %v200
  %207 = vset.pattern.permute.xlu0 0
  %208 = vperm.xlu0 %207, %v183
  %v209 = vpop.permute.xlu0 %208
  %v211 = vmul.f32 %v189, %v209
  %v212 = vmul.f32 %v193, %v209
  %v213 = vmul.f32 %v197, %v209
  %v214 = vmul.f32 %v201, %v209
  %v215 = vadd.f32 %v174, %v211
  %v216 = vadd.f32 %v175, %v212
  %v217 = vadd.f32 %v176, %v213
  %v218 = vadd.f32 %v177, %v214
  %s219 = scalar_lea.vmem %s0, 5
  %v220 = vld [vmem:[%s219] ss:$8 sm:$0x3]
  %s221 = scalar_lea.vmem %s0, 85
  %v222 = vld [vmem:[%s221] ss:$8 sm:$0x3]
  %s223 = scalar_lea.vmem %s1, 40
  %v224 = vld [vmem:[%s223] sm:$0xff]
  %v227 = vlaneseq
  %v228 = vshrl.u32 %v227, 7
  %v229 = vsub.s32 0, %v228
  %v230 = vrot.slane %v220, %v229
  %v231 = vlaneseq
  %v232 = vshrl.u32 %v231, 7
  %v233 = vsub.s32 1, %v232
  %v234 = vrot.slane %v220, %v233
  %v235 = vlaneseq
  %v236 = vshrl.u32 %v235, 7
  %v237 = vsub.s32 0, %v236
  %v238 = vrot.slane %v222, %v237
  %v239 = vlaneseq
  %v240 = vshrl.u32 %v239, 7
  %v241 = vsub.s32 1, %v240
  %v242 = vrot.slane %v222, %v241
  %248 = vset.pattern.permute.xlu0 0
  %249 = vperm.xlu0 %248, %v224
  %v250 = vpop.permute.xlu0 %249
  %v252 = vmul.f32 %v230, %v250
  %v253 = vmul.f32 %v234, %v250
  %v254 = vmul.f32 %v238, %v250
  %v255 = vmul.f32 %v242, %v250
  %v256 = vadd.f32 %v215, %v252
  %v257 = vadd.f32 %v216, %v253
  %v258 = vadd.f32 %v217, %v254
  %v259 = vadd.f32 %v218, %v255
  %s260 = scalar_lea.vmem %s0, 6
  %v261 = vld [vmem:[%s260] ss:$8 sm:$0x3]
  %s262 = scalar_lea.vmem %s0, 86
  %v263 = vld [vmem:[%s262] ss:$8 sm:$0x3]
  %s264 = scalar_lea.vmem %s1, 48
  %v265 = vld [vmem:[%s264] sm:$0xff]
  %v268 = vlaneseq
  %v269 = vshrl.u32 %v268, 7
  %v270 = vsub.s32 0, %v269
  %v271 = vrot.slane %v261, %v270
  %v272 = vlaneseq
  %v273 = vshrl.u32 %v272, 7
  %v274 = vsub.s32 1, %v273
  %v275 = vrot.slane %v261, %v274
  %v276 = vlaneseq
  %v277 = vshrl.u32 %v276, 7
  %v278 = vsub.s32 0, %v277
  %v279 = vrot.slane %v263, %v278
  %v280 = vlaneseq
  %v281 = vshrl.u32 %v280, 7
  %v282 = vsub.s32 1, %v281
  %v283 = vrot.slane %v263, %v282
  %289 = vset.pattern.permute.xlu0 0
  %290 = vperm.xlu0 %289, %v265
  %v291 = vpop.permute.xlu0 %290
  %v293 = vmul.f32 %v271, %v291
  %v294 = vmul.f32 %v275, %v291
  %v295 = vmul.f32 %v279, %v291
  %v296 = vmul.f32 %v283, %v291
  %v297 = vadd.f32 %v256, %v293
  %v298 = vadd.f32 %v257, %v294
  %v299 = vadd.f32 %v258, %v295
  %v300 = vadd.f32 %v259, %v296
  %s301 = scalar_lea.vmem %s0, 7
  %v302 = vld [vmem:[%s301] ss:$8 sm:$0x3]
  %s303 = scalar_lea.vmem %s0, 87
  %v304 = vld [vmem:[%s303] ss:$8 sm:$0x3]
  %s305 = scalar_lea.vmem %s1, 56
  %v306 = vld [vmem:[%s305] sm:$0xff]
  %v309 = vlaneseq
  %v310 = vshrl.u32 %v309, 7
  %v311 = vsub.s32 0, %v310
  %v312 = vrot.slane %v302, %v311
  %v313 = vlaneseq
  %v314 = vshrl.u32 %v313, 7
  %v315 = vsub.s32 1, %v314
  %v316 = vrot.slane %v302, %v315
  %v317 = vlaneseq
  %v318 = vshrl.u32 %v317, 7
  %v319 = vsub.s32 0, %v318
  %v320 = vrot.slane %v304, %v319
  %v321 = vlaneseq
  %v322 = vshrl.u32 %v321, 7
  %v323 = vsub.s32 1, %v322
  %v324 = vrot.slane %v304, %v323
  %330 = vset.pattern.permute.xlu0 0
  %331 = vperm.xlu0 %330, %v306
  %v332 = vpop.permute.xlu0 %331
  %v334 = vmul.f32 %v312, %v332
  %v335 = vmul.f32 %v316, %v332
  %v336 = vmul.f32 %v320, %v332
  %v337 = vmul.f32 %v324, %v332
  %v338 = vadd.f32 %v297, %v334
  %v339 = vadd.f32 %v298, %v335
  %v340 = vadd.f32 %v299, %v336
  %v341 = vadd.f32 %v300, %v337
  %s342 = scalar_lea.vmem %s0, 16
  %v343 = vld [vmem:[%s342] ss:$8 sm:$0x3]
  %s344 = scalar_lea.vmem %s0, 96
  %v345 = vld [vmem:[%s344] ss:$8 sm:$0x3]
  %s346 = scalar_lea.vmem %s1, 64
  %v347 = vld [vmem:[%s346] sm:$0xff]
  %v350 = vlaneseq
  %v351 = vshrl.u32 %v350, 7
  %v352 = vsub.s32 0, %v351
  %v353 = vrot.slane %v343, %v352
  %v354 = vlaneseq
  %v355 = vshrl.u32 %v354, 7
  %v356 = vsub.s32 1, %v355
  %v357 = vrot.slane %v343, %v356
  %v358 = vlaneseq
  %v359 = vshrl.u32 %v358, 7
  %v360 = vsub.s32 0, %v359
  %v361 = vrot.slane %v345, %v360
  %v362 = vlaneseq
  %v363 = vshrl.u32 %v362, 7
  %v364 = vsub.s32 1, %v363
  %v365 = vrot.slane %v345, %v364
  %371 = vset.pattern.permute.xlu0 0
  %372 = vperm.xlu0 %371, %v347
  %v373 = vpop.permute.xlu0 %372
  %v375 = vmul.f32 %v353, %v373
  %v376 = vmul.f32 %v357, %v373
  %v377 = vmul.f32 %v361, %v373
  %v378 = vmul.f32 %v365, %v373
  %v379 = vadd.f32 %v338, %v375
  %v380 = vadd.f32 %v339, %v376
  %v381 = vadd.f32 %v340, %v377
  %v382 = vadd.f32 %v341, %v378
  %s383 = scalar_lea.vmem %s0, 17
  %v384 = vld [vmem:[%s383] ss:$8 sm:$0x3]
  %s385 = scalar_lea.vmem %s0, 97
  %v386 = vld [vmem:[%s385] ss:$8 sm:$0x3]
  %s387 = scalar_lea.vmem %s1, 72
  %v388 = vld [vmem:[%s387] sm:$0xff]
  %v391 = vlaneseq
  %v392 = vshrl.u32 %v391, 7
  %v393 = vsub.s32 0, %v392
  %v394 = vrot.slane %v384, %v393
  %v395 = vlaneseq
  %v396 = vshrl.u32 %v395, 7
  %v397 = vsub.s32 1, %v396
  %v398 = vrot.slane %v384, %v397
  %v399 = vlaneseq
  %v400 = vshrl.u32 %v399, 7
  %v401 = vsub.s32 0, %v400
  %v402 = vrot.slane %v386, %v401
  %v403 = vlaneseq
  %v404 = vshrl.u32 %v403, 7
  %v405 = vsub.s32 1, %v404
  %v406 = vrot.slane %v386, %v405
  %412 = vset.pattern.permute.xlu0 0
  %413 = vperm.xlu0 %412, %v388
  %v414 = vpop.permute.xlu0 %413
  %v416 = vmul.f32 %v394, %v414
  %v417 = vmul.f32 %v398, %v414
  %v418 = vmul.f32 %v402, %v414
  %v419 = vmul.f32 %v406, %v414
  %v420 = vadd.f32 %v379, %v416
  %v421 = vadd.f32 %v380, %v417
  %v422 = vadd.f32 %v381, %v418
  %v423 = vadd.f32 %v382, %v419
  %s424 = scalar_lea.vmem %s0, 18
  %v425 = vld [vmem:[%s424] ss:$8 sm:$0x3]
  %s426 = scalar_lea.vmem %s0, 98
  %v427 = vld [vmem:[%s426] ss:$8 sm:$0x3]
  %s428 = scalar_lea.vmem %s1, 80
  %v429 = vld [vmem:[%s428] sm:$0xff]
  %v432 = vlaneseq
  %v433 = vshrl.u32 %v432, 7
  %v434 = vsub.s32 0, %v433
  %v435 = vrot.slane %v425, %v434
  %v436 = vlaneseq
  %v437 = vshrl.u32 %v436, 7
  %v438 = vsub.s32 1, %v437
  %v439 = vrot.slane %v425, %v438
  %v440 = vlaneseq
  %v441 = vshrl.u32 %v440, 7
  %v442 = vsub.s32 0, %v441
  %v443 = vrot.slane %v427, %v442
  %v444 = vlaneseq
  %v445 = vshrl.u32 %v444, 7
  %v446 = vsub.s32 1, %v445
  %v447 = vrot.slane %v427, %v446
  %453 = vset.pattern.permute.xlu0 0
  %454 = vperm.xlu0 %453, %v429
  %v455 = vpop.permute.xlu0 %454
  %v457 = vmul.f32 %v435, %v455
  %v458 = vmul.f32 %v439, %v455
  %v459 = vmul.f32 %v443, %v455
  %v460 = vmul.f32 %v447, %v455
  %v461 = vadd.f32 %v420, %v457
  %v462 = vadd.f32 %v421, %v458
  %v463 = vadd.f32 %v422, %v459
  %v464 = vadd.f32 %v423, %v460
  %s465 = scalar_lea.vmem %s0, 19
  %v466 = vld [vmem:[%s465] ss:$8 sm:$0x3]
  %s467 = scalar_lea.vmem %s0, 99
  %v468 = vld [vmem:[%s467] ss:$8 sm:$0x3]
  %s469 = scalar_lea.vmem %s1, 88
  %v470 = vld [vmem:[%s469] sm:$0xff]
  %v473 = vlaneseq
  %v474 = vshrl.u32 %v473, 7
  %v475 = vsub.s32 0, %v474
  %v476 = vrot.slane %v466, %v475
  %v477 = vlaneseq
  %v478 = vshrl.u32 %v477, 7
  %v479 = vsub.s32 1, %v478
  %v480 = vrot.slane %v466, %v479
  %v481 = vlaneseq
  %v482 = vshrl.u32 %v481, 7
  %v483 = vsub.s32 0, %v482
  %v484 = vrot.slane %v468, %v483
  %v485 = vlaneseq
  %v486 = vshrl.u32 %v485, 7
  %v487 = vsub.s32 1, %v486
  %v488 = vrot.slane %v468, %v487
  %494 = vset.pattern.permute.xlu0 0
  %495 = vperm.xlu0 %494, %v470
  %v496 = vpop.permute.xlu0 %495
  %v498 = vmul.f32 %v476, %v496
  %v499 = vmul.f32 %v480, %v496
  %v500 = vmul.f32 %v484, %v496
  %v501 = vmul.f32 %v488, %v496
  %v502 = vadd.f32 %v461, %v498
  %v503 = vadd.f32 %v462, %v499
  %v504 = vadd.f32 %v463, %v500
  %v505 = vadd.f32 %v464, %v501
  %s506 = scalar_lea.vmem %s0, 20
  %v507 = vld [vmem:[%s506] ss:$8 sm:$0x3]
  %s508 = scalar_lea.vmem %s0, 100
  %v509 = vld [vmem:[%s508] ss:$8 sm:$0x3]
  %s510 = scalar_lea.vmem %s1, 96
  %v511 = vld [vmem:[%s510] sm:$0xff]
  %v514 = vlaneseq
  %v515 = vshrl.u32 %v514, 7
  %v516 = vsub.s32 0, %v515
  %v517 = vrot.slane %v507, %v516
  %v518 = vlaneseq
  %v519 = vshrl.u32 %v518, 7
  %v520 = vsub.s32 1, %v519
  %v521 = vrot.slane %v507, %v520
  %v522 = vlaneseq
  %v523 = vshrl.u32 %v522, 7
  %v524 = vsub.s32 0, %v523
  %v525 = vrot.slane %v509, %v524
  %v526 = vlaneseq
  %v527 = vshrl.u32 %v526, 7
  %v528 = vsub.s32 1, %v527
  %v529 = vrot.slane %v509, %v528
  %535 = vset.pattern.permute.xlu0 0
  %536 = vperm.xlu0 %535, %v511
  %v537 = vpop.permute.xlu0 %536
  %v539 = vmul.f32 %v517, %v537
  %v540 = vmul.f32 %v521, %v537
  %v541 = vmul.f32 %v525, %v537
  %v542 = vmul.f32 %v529, %v537
  %v543 = vadd.f32 %v502, %v539
  %v544 = vadd.f32 %v503, %v540
  %v545 = vadd.f32 %v504, %v541
  %v546 = vadd.f32 %v505, %v542
  %s547 = scalar_lea.vmem %s0, 21
  %v548 = vld [vmem:[%s547] ss:$8 sm:$0x3]
  %s549 = scalar_lea.vmem %s0, 101
  %v550 = vld [vmem:[%s549] ss:$8 sm:$0x3]
  %s551 = scalar_lea.vmem %s1, 104
  %v552 = vld [vmem:[%s551] sm:$0xff]
  %v555 = vlaneseq
  %v556 = vshrl.u32 %v555, 7
  %v557 = vsub.s32 0, %v556
  %v558 = vrot.slane %v548, %v557
  %v559 = vlaneseq
  %v560 = vshrl.u32 %v559, 7
  %v561 = vsub.s32 1, %v560
  %v562 = vrot.slane %v548, %v561
  %v563 = vlaneseq
  %v564 = vshrl.u32 %v563, 7
  %v565 = vsub.s32 0, %v564
  %v566 = vrot.slane %v550, %v565
  %v567 = vlaneseq
  %v568 = vshrl.u32 %v567, 7
  %v569 = vsub.s32 1, %v568
  %v570 = vrot.slane %v550, %v569
  %576 = vset.pattern.permute.xlu0 0
  %577 = vperm.xlu0 %576, %v552
  %v578 = vpop.permute.xlu0 %577
  %v580 = vmul.f32 %v558, %v578
  %v581 = vmul.f32 %v562, %v578
  %v582 = vmul.f32 %v566, %v578
  %v583 = vmul.f32 %v570, %v578
  %v584 = vadd.f32 %v543, %v580
  %v585 = vadd.f32 %v544, %v581
  %v586 = vadd.f32 %v545, %v582
  %v587 = vadd.f32 %v546, %v583
  %s588 = scalar_lea.vmem %s0, 22
  %v589 = vld [vmem:[%s588] ss:$8 sm:$0x3]
  %s590 = scalar_lea.vmem %s0, 102
  %v591 = vld [vmem:[%s590] ss:$8 sm:$0x3]
  %s592 = scalar_lea.vmem %s1, 112
  %v593 = vld [vmem:[%s592] sm:$0xff]
  %v596 = vlaneseq
  %v597 = vshrl.u32 %v596, 7
  %v598 = vsub.s32 0, %v597
  %v599 = vrot.slane %v589, %v598
  %v600 = vlaneseq
  %v601 = vshrl.u32 %v600, 7
  %v602 = vsub.s32 1, %v601
  %v603 = vrot.slane %v589, %v602
  %v604 = vlaneseq
  %v605 = vshrl.u32 %v604, 7
  %v606 = vsub.s32 0, %v605
  %v607 = vrot.slane %v591, %v606
  %v608 = vlaneseq
  %v609 = vshrl.u32 %v608, 7
  %v610 = vsub.s32 1, %v609
  %v611 = vrot.slane %v591, %v610
  %617 = vset.pattern.permute.xlu0 0
  %618 = vperm.xlu0 %617, %v593
  %v619 = vpop.permute.xlu0 %618
  %v621 = vmul.f32 %v599, %v619
  %v622 = vmul.f32 %v603, %v619
  %v623 = vmul.f32 %v607, %v619
  %v624 = vmul.f32 %v611, %v619
  %v625 = vadd.f32 %v584, %v621
  %v626 = vadd.f32 %v585, %v622
  %v627 = vadd.f32 %v586, %v623
  %v628 = vadd.f32 %v587, %v624
  %s629 = scalar_lea.vmem %s0, 23
  %v630 = vld [vmem:[%s629] ss:$8 sm:$0x3]
  %s631 = scalar_lea.vmem %s0, 103
  %v632 = vld [vmem:[%s631] ss:$8 sm:$0x3]
  %s633 = scalar_lea.vmem %s1, 120
  %v634 = vld [vmem:[%s633] sm:$0xff]
  %v637 = vlaneseq
  %v638 = vshrl.u32 %v637, 7
  %v639 = vsub.s32 0, %v638
  %v640 = vrot.slane %v630, %v639
  %v641 = vlaneseq
  %v642 = vshrl.u32 %v641, 7
  %v643 = vsub.s32 1, %v642
  %v644 = vrot.slane %v630, %v643
  %v645 = vlaneseq
  %v646 = vshrl.u32 %v645, 7
  %v647 = vsub.s32 0, %v646
  %v648 = vrot.slane %v632, %v647
  %v649 = vlaneseq
  %v650 = vshrl.u32 %v649, 7
  %v651 = vsub.s32 1, %v650
  %v652 = vrot.slane %v632, %v651
  %658 = vset.pattern.permute.xlu0 0
  %659 = vperm.xlu0 %658, %v634
  %v660 = vpop.permute.xlu0 %659
  %v662 = vmul.f32 %v640, %v660
  %v663 = vmul.f32 %v644, %v660
  %v664 = vmul.f32 %v648, %v660
  %v665 = vmul.f32 %v652, %v660
  %v666 = vadd.f32 %v625, %v662
  %v667 = vadd.f32 %v626, %v663
  %v668 = vadd.f32 %v627, %v664
  %v669 = vadd.f32 %v628, %v665
  %s670 = scalar_lea.vmem %s0, 32
  %v671 = vld [vmem:[%s670] ss:$8 sm:$0x3]
  %s672 = scalar_lea.vmem %s0, 112
  %v673 = vld [vmem:[%s672] ss:$8 sm:$0x3]
  %s674 = scalar_lea.vmem %s1, 128
  %v675 = vld [vmem:[%s674] sm:$0xff]
  %v678 = vlaneseq
  %v679 = vshrl.u32 %v678, 7
  %v680 = vsub.s32 0, %v679
  %v681 = vrot.slane %v671, %v680
  %v682 = vlaneseq
  %v683 = vshrl.u32 %v682, 7
  %v684 = vsub.s32 1, %v683
  %v685 = vrot.slane %v671, %v684
  %v686 = vlaneseq
  %v687 = vshrl.u32 %v686, 7
  %v688 = vsub.s32 0, %v687
  %v689 = vrot.slane %v673, %v688
  %v690 = vlaneseq
  %v691 = vshrl.u32 %v690, 7
  %v692 = vsub.s32 1, %v691
  %v693 = vrot.slane %v673, %v692
  %699 = vset.pattern.permute.xlu0 0
  %700 = vperm.xlu0 %699, %v675
  %v701 = vpop.permute.xlu0 %700
  %v703 = vmul.f32 %v681, %v701
  %v704 = vmul.f32 %v685, %v701
  %v705 = vmul.f32 %v689, %v701
  %v706 = vmul.f32 %v693, %v701
  %v707 = vadd.f32 %v666, %v703
  %v708 = vadd.f32 %v667, %v704
  %v709 = vadd.f32 %v668, %v705
  %v710 = vadd.f32 %v669, %v706
  %s711 = scalar_lea.vmem %s0, 33
  %v712 = vld [vmem:[%s711] ss:$8 sm:$0x3]
  %s713 = scalar_lea.vmem %s0, 113
  %v714 = vld [vmem:[%s713] ss:$8 sm:$0x3]
  %s715 = scalar_lea.vmem %s1, 136
  %v716 = vld [vmem:[%s715] sm:$0xff]
  %v719 = vlaneseq
  %v720 = vshrl.u32 %v719, 7
  %v721 = vsub.s32 0, %v720
  %v722 = vrot.slane %v712, %v721
  %v723 = vlaneseq
  %v724 = vshrl.u32 %v723, 7
  %v725 = vsub.s32 1, %v724
  %v726 = vrot.slane %v712, %v725
  %v727 = vlaneseq
  %v728 = vshrl.u32 %v727, 7
  %v729 = vsub.s32 0, %v728
  %v730 = vrot.slane %v714, %v729
  %v731 = vlaneseq
  %v732 = vshrl.u32 %v731, 7
  %v733 = vsub.s32 1, %v732
  %v734 = vrot.slane %v714, %v733
  %740 = vset.pattern.permute.xlu0 0
  %741 = vperm.xlu0 %740, %v716
  %v742 = vpop.permute.xlu0 %741
  %v744 = vmul.f32 %v722, %v742
  %v745 = vmul.f32 %v726, %v742
  %v746 = vmul.f32 %v730, %v742
  %v747 = vmul.f32 %v734, %v742
  %v748 = vadd.f32 %v707, %v744
  %v749 = vadd.f32 %v708, %v745
  %v750 = vadd.f32 %v709, %v746
  %v751 = vadd.f32 %v710, %v747
  %s752 = scalar_lea.vmem %s0, 34
  %v753 = vld [vmem:[%s752] ss:$8 sm:$0x3]
  %s754 = scalar_lea.vmem %s0, 114
  %v755 = vld [vmem:[%s754] ss:$8 sm:$0x3]
  %s756 = scalar_lea.vmem %s1, 144
  %v757 = vld [vmem:[%s756] sm:$0xff]
  %v760 = vlaneseq
  %v761 = vshrl.u32 %v760, 7
  %v762 = vsub.s32 0, %v761
  %v763 = vrot.slane %v753, %v762
  %v764 = vlaneseq
  %v765 = vshrl.u32 %v764, 7
  %v766 = vsub.s32 1, %v765
  %v767 = vrot.slane %v753, %v766
  %v768 = vlaneseq
  %v769 = vshrl.u32 %v768, 7
  %v770 = vsub.s32 0, %v769
  %v771 = vrot.slane %v755, %v770
  %v772 = vlaneseq
  %v773 = vshrl.u32 %v772, 7
  %v774 = vsub.s32 1, %v773
  %v775 = vrot.slane %v755, %v774
  %781 = vset.pattern.permute.xlu0 0
  %782 = vperm.xlu0 %781, %v757
  %v783 = vpop.permute.xlu0 %782
  %v785 = vmul.f32 %v763, %v783
  %v786 = vmul.f32 %v767, %v783
  %v787 = vmul.f32 %v771, %v783
  %v788 = vmul.f32 %v775, %v783
  %v789 = vadd.f32 %v748, %v785
  %v790 = vadd.f32 %v749, %v786
  %v791 = vadd.f32 %v750, %v787
  %v792 = vadd.f32 %v751, %v788
  %s793 = scalar_lea.vmem %s0, 35
  %v794 = vld [vmem:[%s793] ss:$8 sm:$0x3]
  %s795 = scalar_lea.vmem %s0, 115
  %v796 = vld [vmem:[%s795] ss:$8 sm:$0x3]
  %s797 = scalar_lea.vmem %s1, 152
  %v798 = vld [vmem:[%s797] sm:$0xff]
  %v801 = vlaneseq
  %v802 = vshrl.u32 %v801, 7
  %v803 = vsub.s32 0, %v802
  %v804 = vrot.slane %v794, %v803
  %v805 = vlaneseq
  %v806 = vshrl.u32 %v805, 7
  %v807 = vsub.s32 1, %v806
  %v808 = vrot.slane %v794, %v807
  %v809 = vlaneseq
  %v810 = vshrl.u32 %v809, 7
  %v811 = vsub.s32 0, %v810
  %v812 = vrot.slane %v796, %v811
  %v813 = vlaneseq
  %v814 = vshrl.u32 %v813, 7
  %v815 = vsub.s32 1, %v814
  %v816 = vrot.slane %v796, %v815
  %822 = vset.pattern.permute.xlu0 0
  %823 = vperm.xlu0 %822, %v798
  %v824 = vpop.permute.xlu0 %823
  %v826 = vmul.f32 %v804, %v824
  %v827 = vmul.f32 %v808, %v824
  %v828 = vmul.f32 %v812, %v824
  %v829 = vmul.f32 %v816, %v824
  %v830 = vadd.f32 %v789, %v826
  %v831 = vadd.f32 %v790, %v827
  %v832 = vadd.f32 %v791, %v828
  %v833 = vadd.f32 %v792, %v829
  %s834 = scalar_lea.vmem %s0, 36
  %v835 = vld [vmem:[%s834] ss:$8 sm:$0x3]
  %s836 = scalar_lea.vmem %s0, 116
  %v837 = vld [vmem:[%s836] ss:$8 sm:$0x3]
  %s838 = scalar_lea.vmem %s1, 160
  %v839 = vld [vmem:[%s838] sm:$0xff]
  %v842 = vlaneseq
  %v843 = vshrl.u32 %v842, 7
  %v844 = vsub.s32 0, %v843
  %v845 = vrot.slane %v835, %v844
  %v846 = vlaneseq
  %v847 = vshrl.u32 %v846, 7
  %v848 = vsub.s32 1, %v847
  %v849 = vrot.slane %v835, %v848
  %v850 = vlaneseq
  %v851 = vshrl.u32 %v850, 7
  %v852 = vsub.s32 0, %v851
  %v853 = vrot.slane %v837, %v852
  %v854 = vlaneseq
  %v855 = vshrl.u32 %v854, 7
  %v856 = vsub.s32 1, %v855
  %v857 = vrot.slane %v837, %v856
  %863 = vset.pattern.permute.xlu0 0
  %864 = vperm.xlu0 %863, %v839
  %v865 = vpop.permute.xlu0 %864
  %v867 = vmul.f32 %v845, %v865
  %v868 = vmul.f32 %v849, %v865
  %v869 = vmul.f32 %v853, %v865
  %v870 = vmul.f32 %v857, %v865
  %v871 = vadd.f32 %v830, %v867
  %v872 = vadd.f32 %v831, %v868
  %v873 = vadd.f32 %v832, %v869
  %v874 = vadd.f32 %v833, %v870
  %s875 = scalar_lea.vmem %s0, 37
  %v876 = vld [vmem:[%s875] ss:$8 sm:$0x3]
  %s877 = scalar_lea.vmem %s0, 117
  %v878 = vld [vmem:[%s877] ss:$8 sm:$0x3]
  %s879 = scalar_lea.vmem %s1, 168
  %v880 = vld [vmem:[%s879] sm:$0xff]
  %v883 = vlaneseq
  %v884 = vshrl.u32 %v883, 7
  %v885 = vsub.s32 0, %v884
  %v886 = vrot.slane %v876, %v885
  %v887 = vlaneseq
  %v888 = vshrl.u32 %v887, 7
  %v889 = vsub.s32 1, %v888
  %v890 = vrot.slane %v876, %v889
  %v891 = vlaneseq
  %v892 = vshrl.u32 %v891, 7
  %v893 = vsub.s32 0, %v892
  %v894 = vrot.slane %v878, %v893
  %v895 = vlaneseq
  %v896 = vshrl.u32 %v895, 7
  %v897 = vsub.s32 1, %v896
  %v898 = vrot.slane %v878, %v897
  %904 = vset.pattern.permute.xlu0 0
  %905 = vperm.xlu0 %904, %v880
  %v906 = vpop.permute.xlu0 %905
  %v908 = vmul.f32 %v886, %v906
  %v909 = vmul.f32 %v890, %v906
  %v910 = vmul.f32 %v894, %v906
  %v911 = vmul.f32 %v898, %v906
  %v912 = vadd.f32 %v871, %v908
  %v913 = vadd.f32 %v872, %v909
  %v914 = vadd.f32 %v873, %v910
  %v915 = vadd.f32 %v874, %v911
  %s916 = scalar_lea.vmem %s0, 38
  %v917 = vld [vmem:[%s916] ss:$8 sm:$0x3]
  %s918 = scalar_lea.vmem %s0, 118
  %v919 = vld [vmem:[%s918] ss:$8 sm:$0x3]
  %s920 = scalar_lea.vmem %s1, 176
  %v921 = vld [vmem:[%s920] sm:$0xff]
  %v924 = vlaneseq
  %v925 = vshrl.u32 %v924, 7
  %v926 = vsub.s32 0, %v925
  %v927 = vrot.slane %v917, %v926
  %v928 = vlaneseq
  %v929 = vshrl.u32 %v928, 7
  %v930 = vsub.s32 1, %v929
  %v931 = vrot.slane %v917, %v930
  %v932 = vlaneseq
  %v933 = vshrl.u32 %v932, 7
  %v934 = vsub.s32 0, %v933
  %v935 = vrot.slane %v919, %v934
  %v936 = vlaneseq
  %v937 = vshrl.u32 %v936, 7
  %v938 = vsub.s32 1, %v937
  %v939 = vrot.slane %v919, %v938
  %945 = vset.pattern.permute.xlu0 0
  %946 = vperm.xlu0 %945, %v921
  %v947 = vpop.permute.xlu0 %946
  %v949 = vmul.f32 %v927, %v947
  %v950 = vmul.f32 %v931, %v947
  %v951 = vmul.f32 %v935, %v947
  %v952 = vmul.f32 %v939, %v947
  %v953 = vadd.f32 %v912, %v949
  %v954 = vadd.f32 %v913, %v950
  %v955 = vadd.f32 %v914, %v951
  %v956 = vadd.f32 %v915, %v952
  %s957 = scalar_lea.vmem %s0, 39
  %v958 = vld [vmem:[%s957] ss:$8 sm:$0x3]
  %s959 = scalar_lea.vmem %s0, 119
  %v960 = vld [vmem:[%s959] ss:$8 sm:$0x3]
  %s961 = scalar_lea.vmem %s1, 184
  %v962 = vld [vmem:[%s961] sm:$0xff]
  %v965 = vlaneseq
  %v966 = vshrl.u32 %v965, 7
  %v967 = vsub.s32 0, %v966
  %v968 = vrot.slane %v958, %v967
  %v969 = vlaneseq
  %v970 = vshrl.u32 %v969, 7
  %v971 = vsub.s32 1, %v970
  %v972 = vrot.slane %v958, %v971
  %v973 = vlaneseq
  %v974 = vshrl.u32 %v973, 7
  %v975 = vsub.s32 0, %v974
  %v976 = vrot.slane %v960, %v975
  %v977 = vlaneseq
  %v978 = vshrl.u32 %v977, 7
  %v979 = vsub.s32 1, %v978
  %v980 = vrot.slane %v960, %v979
  %986 = vset.pattern.permute.xlu0 0
  %987 = vperm.xlu0 %986, %v962
  %v988 = vpop.permute.xlu0 %987
  %v990 = vmul.f32 %v968, %v988
  %v991 = vmul.f32 %v972, %v988
  %v992 = vmul.f32 %v976, %v988
  %v993 = vmul.f32 %v980, %v988
  %v994 = vadd.f32 %v953, %v990
  %v995 = vadd.f32 %v954, %v991
  %v996 = vadd.f32 %v955, %v992
  %v997 = vadd.f32 %v956, %v993
  %s998 = scalar_lea.vmem %s0, 48
  %v999 = vld [vmem:[%s998] ss:$8 sm:$0x3]
  %s1000 = scalar_lea.vmem %s0, 128
  %v1001 = vld [vmem:[%s1000] ss:$8 sm:$0x3]
  %s1002 = scalar_lea.vmem %s1, 192
  %v1003 = vld [vmem:[%s1002] sm:$0xff]
  %v1006 = vlaneseq
  %v1007 = vshrl.u32 %v1006, 7
  %v1008 = vsub.s32 0, %v1007
  %v1009 = vrot.slane %v999, %v1008
  %v1010 = vlaneseq
  %v1011 = vshrl.u32 %v1010, 7
  %v1012 = vsub.s32 1, %v1011
  %v1013 = vrot.slane %v999, %v1012
  %v1014 = vlaneseq
  %v1015 = vshrl.u32 %v1014, 7
  %v1016 = vsub.s32 0, %v1015
  %v1017 = vrot.slane %v1001, %v1016
  %v1018 = vlaneseq
  %v1019 = vshrl.u32 %v1018, 7
  %v1020 = vsub.s32 1, %v1019
  %v1021 = vrot.slane %v1001, %v1020
  %1027 = vset.pattern.permute.xlu0 0
  %1028 = vperm.xlu0 %1027, %v1003
  %v1029 = vpop.permute.xlu0 %1028
  %v1031 = vmul.f32 %v1009, %v1029
  %v1032 = vmul.f32 %v1013, %v1029
  %v1033 = vmul.f32 %v1017, %v1029
  %v1034 = vmul.f32 %v1021, %v1029
  %v1035 = vadd.f32 %v994, %v1031
  %v1036 = vadd.f32 %v995, %v1032
  %v1037 = vadd.f32 %v996, %v1033
  %v1038 = vadd.f32 %v997, %v1034
  %s1039 = scalar_lea.vmem %s0, 49
  %v1040 = vld [vmem:[%s1039] ss:$8 sm:$0x3]
  %s1041 = scalar_lea.vmem %s0, 129
  %v1042 = vld [vmem:[%s1041] ss:$8 sm:$0x3]
  %s1043 = scalar_lea.vmem %s1, 200
  %v1044 = vld [vmem:[%s1043] sm:$0xff]
  %v1047 = vlaneseq
  %v1048 = vshrl.u32 %v1047, 7
  %v1049 = vsub.s32 0, %v1048
  %v1050 = vrot.slane %v1040, %v1049
  %v1051 = vlaneseq
  %v1052 = vshrl.u32 %v1051, 7
  %v1053 = vsub.s32 1, %v1052
  %v1054 = vrot.slane %v1040, %v1053
  %v1055 = vlaneseq
  %v1056 = vshrl.u32 %v1055, 7
  %v1057 = vsub.s32 0, %v1056
  %v1058 = vrot.slane %v1042, %v1057
  %v1059 = vlaneseq
  %v1060 = vshrl.u32 %v1059, 7
  %v1061 = vsub.s32 1, %v1060
  %v1062 = vrot.slane %v1042, %v1061
  %1068 = vset.pattern.permute.xlu0 0
  %1069 = vperm.xlu0 %1068, %v1044
  %v1070 = vpop.permute.xlu0 %1069
  %v1072 = vmul.f32 %v1050, %v1070
  %v1073 = vmul.f32 %v1054, %v1070
  %v1074 = vmul.f32 %v1058, %v1070
  %v1075 = vmul.f32 %v1062, %v1070
  %v1076 = vadd.f32 %v1035, %v1072
  %v1077 = vadd.f32 %v1036, %v1073
  %v1078 = vadd.f32 %v1037, %v1074
  %v1079 = vadd.f32 %v1038, %v1075
  %s1080 = scalar_lea.vmem %s0, 50
  %v1081 = vld [vmem:[%s1080] ss:$8 sm:$0x3]
  %s1082 = scalar_lea.vmem %s0, 130
  %v1083 = vld [vmem:[%s1082] ss:$8 sm:$0x3]
  %s1084 = scalar_lea.vmem %s1, 208
  %v1085 = vld [vmem:[%s1084] sm:$0xff]
  %v1088 = vlaneseq
  %v1089 = vshrl.u32 %v1088, 7
  %v1090 = vsub.s32 0, %v1089
  %v1091 = vrot.slane %v1081, %v1090
  %v1092 = vlaneseq
  %v1093 = vshrl.u32 %v1092, 7
  %v1094 = vsub.s32 1, %v1093
  %v1095 = vrot.slane %v1081, %v1094
  %v1096 = vlaneseq
  %v1097 = vshrl.u32 %v1096, 7
  %v1098 = vsub.s32 0, %v1097
  %v1099 = vrot.slane %v1083, %v1098
  %v1100 = vlaneseq
  %v1101 = vshrl.u32 %v1100, 7
  %v1102 = vsub.s32 1, %v1101
  %v1103 = vrot.slane %v1083, %v1102
  %1109 = vset.pattern.permute.xlu0 0
  %1110 = vperm.xlu0 %1109, %v1085
  %v1111 = vpop.permute.xlu0 %1110
  %v1113 = vmul.f32 %v1091, %v1111
  %v1114 = vmul.f32 %v1095, %v1111
  %v1115 = vmul.f32 %v1099, %v1111
  %v1116 = vmul.f32 %v1103, %v1111
  %v1117 = vadd.f32 %v1076, %v1113
  %v1118 = vadd.f32 %v1077, %v1114
  %v1119 = vadd.f32 %v1078, %v1115
  %v1120 = vadd.f32 %v1079, %v1116
  %s1121 = scalar_lea.vmem %s0, 51
  %v1122 = vld [vmem:[%s1121] ss:$8 sm:$0x3]
  %s1123 = scalar_lea.vmem %s0, 131
  %v1124 = vld [vmem:[%s1123] ss:$8 sm:$0x3]
  %s1125 = scalar_lea.vmem %s1, 216
  %v1126 = vld [vmem:[%s1125] sm:$0xff]
  %v1129 = vlaneseq
  %v1130 = vshrl.u32 %v1129, 7
  %v1131 = vsub.s32 0, %v1130
  %v1132 = vrot.slane %v1122, %v1131
  %v1133 = vlaneseq
  %v1134 = vshrl.u32 %v1133, 7
  %v1135 = vsub.s32 1, %v1134
  %v1136 = vrot.slane %v1122, %v1135
  %v1137 = vlaneseq
  %v1138 = vshrl.u32 %v1137, 7
  %v1139 = vsub.s32 0, %v1138
  %v1140 = vrot.slane %v1124, %v1139
  %v1141 = vlaneseq
  %v1142 = vshrl.u32 %v1141, 7
  %v1143 = vsub.s32 1, %v1142
  %v1144 = vrot.slane %v1124, %v1143
  %1150 = vset.pattern.permute.xlu0 0
  %1151 = vperm.xlu0 %1150, %v1126
  %v1152 = vpop.permute.xlu0 %1151
  %v1154 = vmul.f32 %v1132, %v1152
  %v1155 = vmul.f32 %v1136, %v1152
  %v1156 = vmul.f32 %v1140, %v1152
  %v1157 = vmul.f32 %v1144, %v1152
  %v1158 = vadd.f32 %v1117, %v1154
  %v1159 = vadd.f32 %v1118, %v1155
  %v1160 = vadd.f32 %v1119, %v1156
  %v1161 = vadd.f32 %v1120, %v1157
  %s1162 = scalar_lea.vmem %s0, 52
  %v1163 = vld [vmem:[%s1162] ss:$8 sm:$0x3]
  %s1164 = scalar_lea.vmem %s0, 132
  %v1165 = vld [vmem:[%s1164] ss:$8 sm:$0x3]
  %s1166 = scalar_lea.vmem %s1, 224
  %v1167 = vld [vmem:[%s1166] sm:$0xff]
  %v1170 = vlaneseq
  %v1171 = vshrl.u32 %v1170, 7
  %v1172 = vsub.s32 0, %v1171
  %v1173 = vrot.slane %v1163, %v1172
  %v1174 = vlaneseq
  %v1175 = vshrl.u32 %v1174, 7
  %v1176 = vsub.s32 1, %v1175
  %v1177 = vrot.slane %v1163, %v1176
  %v1178 = vlaneseq
  %v1179 = vshrl.u32 %v1178, 7
  %v1180 = vsub.s32 0, %v1179
  %v1181 = vrot.slane %v1165, %v1180
  %v1182 = vlaneseq
  %v1183 = vshrl.u32 %v1182, 7
  %v1184 = vsub.s32 1, %v1183
  %v1185 = vrot.slane %v1165, %v1184
  %1191 = vset.pattern.permute.xlu0 0
  %1192 = vperm.xlu0 %1191, %v1167
  %v1193 = vpop.permute.xlu0 %1192
  %v1195 = vmul.f32 %v1173, %v1193
  %v1196 = vmul.f32 %v1177, %v1193
  %v1197 = vmul.f32 %v1181, %v1193
  %v1198 = vmul.f32 %v1185, %v1193
  %v1199 = vadd.f32 %v1158, %v1195
  %v1200 = vadd.f32 %v1159, %v1196
  %v1201 = vadd.f32 %v1160, %v1197
  %v1202 = vadd.f32 %v1161, %v1198
  %s1203 = scalar_lea.vmem %s0, 53
  %v1204 = vld [vmem:[%s1203] ss:$8 sm:$0x3]
  %s1205 = scalar_lea.vmem %s0, 133
  %v1206 = vld [vmem:[%s1205] ss:$8 sm:$0x3]
  %s1207 = scalar_lea.vmem %s1, 232
  %v1208 = vld [vmem:[%s1207] sm:$0xff]
  %v1211 = vlaneseq
  %v1212 = vshrl.u32 %v1211, 7
  %v1213 = vsub.s32 0, %v1212
  %v1214 = vrot.slane %v1204, %v1213
  %v1215 = vlaneseq
  %v1216 = vshrl.u32 %v1215, 7
  %v1217 = vsub.s32 1, %v1216
  %v1218 = vrot.slane %v1204, %v1217
  %v1219 = vlaneseq
  %v1220 = vshrl.u32 %v1219, 7
  %v1221 = vsub.s32 0, %v1220
  %v1222 = vrot.slane %v1206, %v1221
  %v1223 = vlaneseq
  %v1224 = vshrl.u32 %v1223, 7
  %v1225 = vsub.s32 1, %v1224
  %v1226 = vrot.slane %v1206, %v1225
  %1232 = vset.pattern.permute.xlu0 0
  %1233 = vperm.xlu0 %1232, %v1208
  %v1234 = vpop.permute.xlu0 %1233
  %v1236 = vmul.f32 %v1214, %v1234
  %v1237 = vmul.f32 %v1218, %v1234
  %v1238 = vmul.f32 %v1222, %v1234
  %v1239 = vmul.f32 %v1226, %v1234
  %v1240 = vadd.f32 %v1199, %v1236
  %v1241 = vadd.f32 %v1200, %v1237
  %v1242 = vadd.f32 %v1201, %v1238
  %v1243 = vadd.f32 %v1202, %v1239
  %s1244 = scalar_lea.vmem %s0, 54
  %v1245 = vld [vmem:[%s1244] ss:$8 sm:$0x3]
  %s1246 = scalar_lea.vmem %s0, 134
  %v1247 = vld [vmem:[%s1246] ss:$8 sm:$0x3]
  %s1248 = scalar_lea.vmem %s1, 240
  %v1249 = vld [vmem:[%s1248] sm:$0xff]
  %v1252 = vlaneseq
  %v1253 = vshrl.u32 %v1252, 7
  %v1254 = vsub.s32 0, %v1253
  %v1255 = vrot.slane %v1245, %v1254
  %v1256 = vlaneseq
  %v1257 = vshrl.u32 %v1256, 7
  %v1258 = vsub.s32 1, %v1257
  %v1259 = vrot.slane %v1245, %v1258
  %v1260 = vlaneseq
  %v1261 = vshrl.u32 %v1260, 7
  %v1262 = vsub.s32 0, %v1261
  %v1263 = vrot.slane %v1247, %v1262
  %v1264 = vlaneseq
  %v1265 = vshrl.u32 %v1264, 7
  %v1266 = vsub.s32 1, %v1265
  %v1267 = vrot.slane %v1247, %v1266
  %1273 = vset.pattern.permute.xlu0 0
  %1274 = vperm.xlu0 %1273, %v1249
  %v1275 = vpop.permute.xlu0 %1274
  %v1277 = vmul.f32 %v1255, %v1275
  %v1278 = vmul.f32 %v1259, %v1275
  %v1279 = vmul.f32 %v1263, %v1275
  %v1280 = vmul.f32 %v1267, %v1275
  %v1281 = vadd.f32 %v1240, %v1277
  %v1282 = vadd.f32 %v1241, %v1278
  %v1283 = vadd.f32 %v1242, %v1279
  %v1284 = vadd.f32 %v1243, %v1280
  %s1285 = scalar_lea.vmem %s0, 55
  %v1286 = vld [vmem:[%s1285] ss:$8 sm:$0x3]
  %s1287 = scalar_lea.vmem %s0, 135
  %v1288 = vld [vmem:[%s1287] ss:$8 sm:$0x3]
  %s1289 = scalar_lea.vmem %s1, 248
  %v1290 = vld [vmem:[%s1289] sm:$0xff]
  %v1293 = vlaneseq
  %v1294 = vshrl.u32 %v1293, 7
  %v1295 = vsub.s32 0, %v1294
  %v1296 = vrot.slane %v1286, %v1295
  %v1297 = vlaneseq
  %v1298 = vshrl.u32 %v1297, 7
  %v1299 = vsub.s32 1, %v1298
  %v1300 = vrot.slane %v1286, %v1299
  %v1301 = vlaneseq
  %v1302 = vshrl.u32 %v1301, 7
  %v1303 = vsub.s32 0, %v1302
  %v1304 = vrot.slane %v1288, %v1303
  %v1305 = vlaneseq
  %v1306 = vshrl.u32 %v1305, 7
  %v1307 = vsub.s32 1, %v1306
  %v1308 = vrot.slane %v1288, %v1307
  %1314 = vset.pattern.permute.xlu0 0
  %1315 = vperm.xlu0 %1314, %v1290
  %v1316 = vpop.permute.xlu0 %1315
  %v1318 = vmul.f32 %v1296, %v1316
  %v1319 = vmul.f32 %v1300, %v1316
  %v1320 = vmul.f32 %v1304, %v1316
  %v1321 = vmul.f32 %v1308, %v1316
  %v1322 = vadd.f32 %v1281, %v1318
  %v1323 = vadd.f32 %v1282, %v1319
  %v1324 = vadd.f32 %v1283, %v1320
  %v1325 = vadd.f32 %v1284, %v1321
  %s1326 = scalar_lea.vmem %s0, 64
  %v1327 = vld [vmem:[%s1326] ss:$8 sm:$0x3]
  %s1328 = scalar_lea.vmem %s0, 144
  %v1329 = vld [vmem:[%s1328] ss:$8 sm:$0x3]
  %s1330 = scalar_lea.vmem %s1, 256
  %v1331 = vld [vmem:[%s1330] sm:$0xff]
  %v1334 = vlaneseq
  %v1335 = vshrl.u32 %v1334, 7
  %v1336 = vsub.s32 0, %v1335
  %v1337 = vrot.slane %v1327, %v1336
  %v1338 = vlaneseq
  %v1339 = vshrl.u32 %v1338, 7
  %v1340 = vsub.s32 1, %v1339
  %v1341 = vrot.slane %v1327, %v1340
  %v1342 = vlaneseq
  %v1343 = vshrl.u32 %v1342, 7
  %v1344 = vsub.s32 0, %v1343
  %v1345 = vrot.slane %v1329, %v1344
  %v1346 = vlaneseq
  %v1347 = vshrl.u32 %v1346, 7
  %v1348 = vsub.s32 1, %v1347
  %v1349 = vrot.slane %v1329, %v1348
  %1355 = vset.pattern.permute.xlu0 0
  %1356 = vperm.xlu0 %1355, %v1331
  %v1357 = vpop.permute.xlu0 %1356
  %v1359 = vmul.f32 %v1337, %v1357
  %v1360 = vmul.f32 %v1341, %v1357
  %v1361 = vmul.f32 %v1345, %v1357
  %v1362 = vmul.f32 %v1349, %v1357
  %v1363 = vadd.f32 %v1322, %v1359
  %v1364 = vadd.f32 %v1323, %v1360
  %v1365 = vadd.f32 %v1324, %v1361
  %v1366 = vadd.f32 %v1325, %v1362
  %s1367 = scalar_lea.vmem %s0, 65
  %v1368 = vld [vmem:[%s1367] ss:$8 sm:$0x3]
  %s1369 = scalar_lea.vmem %s0, 145
  %v1370 = vld [vmem:[%s1369] ss:$8 sm:$0x3]
  %s1371 = scalar_lea.vmem %s1, 264
  %v1372 = vld [vmem:[%s1371] sm:$0xff]
  %v1375 = vlaneseq
  %v1376 = vshrl.u32 %v1375, 7
  %v1377 = vsub.s32 0, %v1376
  %v1378 = vrot.slane %v1368, %v1377
  %v1379 = vlaneseq
  %v1380 = vshrl.u32 %v1379, 7
  %v1381 = vsub.s32 1, %v1380
  %v1382 = vrot.slane %v1368, %v1381
  %v1383 = vlaneseq
  %v1384 = vshrl.u32 %v1383, 7
  %v1385 = vsub.s32 0, %v1384
  %v1386 = vrot.slane %v1370, %v1385
  %v1387 = vlaneseq
  %v1388 = vshrl.u32 %v1387, 7
  %v1389 = vsub.s32 1, %v1388
  %v1390 = vrot.slane %v1370, %v1389
  %1396 = vset.pattern.permute.xlu0 0
  %1397 = vperm.xlu0 %1396, %v1372
  %v1398 = vpop.permute.xlu0 %1397
  %v1400 = vmul.f32 %v1378, %v1398
  %v1401 = vmul.f32 %v1382, %v1398
  %v1402 = vmul.f32 %v1386, %v1398
  %v1403 = vmul.f32 %v1390, %v1398
  %v1404 = vadd.f32 %v1363, %v1400
  %v1405 = vadd.f32 %v1364, %v1401
  %v1406 = vadd.f32 %v1365, %v1402
  %v1407 = vadd.f32 %v1366, %v1403
  %s1408 = scalar_lea.vmem %s0, 66
  %v1409 = vld [vmem:[%s1408] ss:$8 sm:$0x3]
  %s1410 = scalar_lea.vmem %s0, 146
  %v1411 = vld [vmem:[%s1410] ss:$8 sm:$0x3]
  %s1412 = scalar_lea.vmem %s1, 272
  %v1413 = vld [vmem:[%s1412] sm:$0xff]
  %v1416 = vlaneseq
  %v1417 = vshrl.u32 %v1416, 7
  %v1418 = vsub.s32 0, %v1417
  %v1419 = vrot.slane %v1409, %v1418
  %v1420 = vlaneseq
  %v1421 = vshrl.u32 %v1420, 7
  %v1422 = vsub.s32 1, %v1421
  %v1423 = vrot.slane %v1409, %v1422
  %v1424 = vlaneseq
  %v1425 = vshrl.u32 %v1424, 7
  %v1426 = vsub.s32 0, %v1425
  %v1427 = vrot.slane %v1411, %v1426
  %v1428 = vlaneseq
  %v1429 = vshrl.u32 %v1428, 7
  %v1430 = vsub.s32 1, %v1429
  %v1431 = vrot.slane %v1411, %v1430
  %1437 = vset.pattern.permute.xlu0 0
  %1438 = vperm.xlu0 %1437, %v1413
  %v1439 = vpop.permute.xlu0 %1438
  %v1441 = vmul.f32 %v1419, %v1439
  %v1442 = vmul.f32 %v1423, %v1439
  %v1443 = vmul.f32 %v1427, %v1439
  %v1444 = vmul.f32 %v1431, %v1439
  %v1445 = vadd.f32 %v1404, %v1441
  %v1446 = vadd.f32 %v1405, %v1442
  %v1447 = vadd.f32 %v1406, %v1443
  %v1448 = vadd.f32 %v1407, %v1444
  %s1449 = scalar_lea.vmem %s0, 67
  %v1450 = vld [vmem:[%s1449] ss:$8 sm:$0x3]
  %s1451 = scalar_lea.vmem %s0, 147
  %v1452 = vld [vmem:[%s1451] ss:$8 sm:$0x3]
  %s1453 = scalar_lea.vmem %s1, 280
  %v1454 = vld [vmem:[%s1453] sm:$0xff]
  %v1457 = vlaneseq
  %v1458 = vshrl.u32 %v1457, 7
  %v1459 = vsub.s32 0, %v1458
  %v1460 = vrot.slane %v1450, %v1459
  %v1461 = vlaneseq
  %v1462 = vshrl.u32 %v1461, 7
  %v1463 = vsub.s32 1, %v1462
  %v1464 = vrot.slane %v1450, %v1463
  %v1465 = vlaneseq
  %v1466 = vshrl.u32 %v1465, 7
  %v1467 = vsub.s32 0, %v1466
  %v1468 = vrot.slane %v1452, %v1467
  %v1469 = vlaneseq
  %v1470 = vshrl.u32 %v1469, 7
  %v1471 = vsub.s32 1, %v1470
  %v1472 = vrot.slane %v1452, %v1471
  %1478 = vset.pattern.permute.xlu0 0
  %1479 = vperm.xlu0 %1478, %v1454
  %v1480 = vpop.permute.xlu0 %1479
  %v1482 = vmul.f32 %v1460, %v1480
  %v1483 = vmul.f32 %v1464, %v1480
  %v1484 = vmul.f32 %v1468, %v1480
  %v1485 = vmul.f32 %v1472, %v1480
  %v1486 = vadd.f32 %v1445, %v1482
  %v1487 = vadd.f32 %v1446, %v1483
  %v1488 = vadd.f32 %v1447, %v1484
  %v1489 = vadd.f32 %v1448, %v1485
  %1490 = vst [vmem:[%s3] sm:$0xff] %v1486
  %1491 = vst [vmem:[%s3 + $0x8] sm:$0xff] %v1487
  %1492 = vst [vmem:[%s3 + $0x10] sm:$0xff] %v1488
  %1493 = vst [vmem:[%s3 + $0x18] sm:$0xff] %v1489
  // Predicated region
  $region14: #{conv_layer_forward.1} parent=0 // pred_check
    _
  $region15: #{conv_layer_forward.1} parent=0 // pred_check_branch
    %1495 = sbr.rel (0) target = $region17
  $region16: #{conv_layer_forward.1} parent=0 // pred_region
    _
  $region17: #{conv_layer_forward.1} parent=0 // pred_fallthru
    _
  // Predicated region
  $region18: #{conv_layer_forward.1} parent=0 // pred_check
    _
  $region19: #{conv_layer_forward.1} parent=0 // pred_check_branch
    %1497 = sbr.rel (0) target = $region21
  $region20: #{conv_layer_forward.1} parent=0 // pred_region
    _
  $region21: #{conv_layer_forward.1} parent=0 // pred_fallthru
    _

</llo_original>
